<compile_context>
chip_gen: v5e
topology: v5e:2x2
jax: 0.10.0
libtpu: 0.0.40
codegen_flags: <defaults>
</compile_context>

<pallas_src>
import jax
import jax.numpy as jnp
from jax import lax
from jax.experimental import pallas as pl
from jax.experimental.pallas import tpu as pltpu


def simple_conv3d_forward(x, w, b, gamma, beta, eps=1e-5):
    """x: (N, Cin, D, H, W) f32.  Returns [out], out: (N, Cout, D, H, W) f32."""
    N, Cin, D, H, W = x.shape
    Cout = w.shape[0]
    assert w.shape == (Cout, Cin, 3, 3, 3), "kernel_size=3, padding=1, stride=1 only"

    Dp, Hp, Wp = D + 2, H + 2, W + 2
    L = Hp * Wp                    # flattened padded plane length (lane axis)
    off_max = 2 * Wp + 2           # largest in-plane tap offset (kh=kw=2)
    Lext = L + off_max             # zero-extended so static lane slices stay in bounds

    # ---- glue (O(input) bytes): pad spatially, move Cin next to the plane, flatten ----
    xp = jnp.pad(x, ((0, 0), (0, 0), (1, 1), (1, 1), (1, 1)))         # (N,Cin,Dp,Hp,Wp)
    xp = jnp.transpose(xp, (0, 2, 1, 3, 4)).reshape(N, Dp, Cin, L)    # (N,Dp,Cin,L)
    xp = jnp.pad(xp, ((0, 0), (0, 0), (0, 0), (0, off_max)))          # (N,Dp,Cin,Lext)
    xp = xp.astype(jnp.bfloat16)

    # weights (Cout,Cin,kd,kh,kw) -> (kd, kh*3+kw, Cout, Cin), bf16
    w_r = jnp.transpose(w, (2, 3, 4, 0, 1)).reshape(3, 9, Cout, Cin).astype(jnp.bfloat16)

    # in-plane validity mask (1.0 where h<H and w<W) -- used only for the batch stats
    pos = jnp.arange(L, dtype=jnp.int32)
    valid = ((pos % Wp) < W) & ((pos // Wp) < H)
    mask = valid.astype(jnp.float32).reshape(1, L)

    # ---------------------- kernel 1: conv planes + partial stats ----------------------
    def conv_kernel(x0_ref, x1_ref, x2_ref, w_ref, m_ref,
                    out_ref, psum_ref, psq_ref):
        acc = jnp.zeros((Cout, L), jnp.float32)
        for kd, x_ref in enumerate((x0_ref, x1_ref, x2_ref)):
            slab = x_ref[0, 0]                          # (Cin, Lext) bf16
            for j in range(9):
                kh, kw = divmod(j, 3)
                off = kh * Wp + kw                      # static lane shift
                xs = slab[:, off:off + L]               # (Cin, L) shifted view
                wj = w_ref[kd, j]                       # (Cout, Cin)
                acc = acc + jnp.dot(wj, xs, preferred_element_type=jnp.float32)
        out_ref[...] = acc.astype(out_ref.dtype)[None, None]
        m = m_ref[...]                                  # (1, L) masks padded lanes
        psum_ref[...] = jnp.sum(acc * m, axis=-1, keepdims=True)[None, None]
        psq_ref[...] = jnp.sum(acc * acc * m, axis=-1, keepdims=True)[None, None]

    conv_out, psum, psq = pl.pallas_call(
        conv_kernel,
        out_shape=(
            jax.ShapeDtypeStruct((N, D, Cout, L), jnp.bfloat16),    # conv intermediate
            jax.ShapeDtypeStruct((N, D, Cout, 1), jnp.float32),     # per-tile sum
            jax.ShapeDtypeStruct((N, D, Cout, 1), jnp.float32),     # per-tile sum of sq.
        ),
        grid_spec=pltpu.PrefetchScalarGridSpec(
            num_scalar_prefetch=0,
            grid=(N, D),
            in_specs=[
                pl.BlockSpec((1, 1, Cin, Lext), lambda n, d: (n, d, 0, 0)),
                pl.BlockSpec((1, 1, Cin, Lext), lambda n, d: (n, d + 1, 0, 0)),
                pl.BlockSpec((1, 1, Cin, Lext), lambda n, d: (n, d + 2, 0, 0)),
                pl.BlockSpec((3, 9, Cout, Cin), lambda n, d: (0, 0, 0, 0)),
                pl.BlockSpec((1, L), lambda n, d: (0, 0)),
            ],
            out_specs=[
                pl.BlockSpec((1, 1, Cout, L), lambda n, d: (n, d, 0, 0)),
                pl.BlockSpec((1, 1, Cout, 1), lambda n, d: (n, d, 0, 0)),
                pl.BlockSpec((1, 1, Cout, 1), lambda n, d: (n, d, 0, 0)),
            ],
        ),
        compiler_params=pltpu.CompilerParams(
            dimension_semantics=("parallel", "parallel")),
    )(xp, xp, xp, w_r, mask)

    # -------------- glue: BatchNorm3d training-mode batch statistics (f32) -------------
    m_valid = float(N * D * H * W)
    csum = jnp.sum(psum, axis=(0, 1, 3))
    csq = jnp.sum(psq, axis=(0, 1, 3))
    mean = csum / m_valid
    # TODO(synk): E[x^2]-mean^2 cancels catastrophically when |mean| >> std; a second,
    # mean-centered pass would be more robust (the clamp only hides it).
    var = jnp.maximum(csq / m_valid - mean * mean, 0.0)    # biased variance (BN forward)
    inv_std = lax.rsqrt(var + eps)
    scale = (gamma * inv_std).astype(jnp.float32)
    shift = (beta - mean * gamma * inv_std).astype(jnp.float32)

    # pre-broadcast to one plane so kernel 2 is pure elementwise (tiny, loaded once)
    scale_b = jnp.broadcast_to(scale[:, None, None], (Cout, Hp, Wp))[None]
    shift_b = jnp.broadcast_to(shift[:, None, None], (Cout, Hp, Wp))[None]

    conv5 = conv_out.reshape(N, D, Cout, Hp, Wp)            # free row-major reshape

    # -------------- kernel 2: BN affine + GELU, writes NCDHW blocks directly -----------
    def bn_gelu_kernel(x_ref, s_ref, t_ref, o_ref):
        xv = x_ref[0, 0].astype(jnp.float32)                 # (Cout, Hp, Wp)
        y = xv * s_ref[0] + t_ref[0]                         # BN affine
        c0 = 0.7978845608028654                              # sqrt(2/pi)
        g = 0.5 * y * (1.0 + jnp.tanh(c0 * (y + 0.044715 * y * y * y)))  # tanh GELU
        # fold the un-pad slice and the NDHWC->NCDHW transpose into the store
        o_ref[...] = g[:, :H, :W][None, :, None, :, :]

    out = pl.pallas_call(
        bn_gelu_kernel,
        out_shape=jax.ShapeDtypeStruct((N, Cout, D, H, W), jnp.float32),
        grid_spec=pltpu.PrefetchScalarGridSpec(
            num_scalar_prefetch=0,
            grid=(N, D),
            in_specs=[
                pl.BlockSpec((1, 1, Cout, Hp, Wp), lambda n, d: (n, d, 0, 0, 0)),
                pl.BlockSpec((1, Cout, Hp, Wp), lambda n, d: (0, 0, 0, 0)),
                pl.BlockSpec((1, Cout, Hp, Wp), lambda n, d: (0, 0, 0, 0)),
            ],
            out_specs=pl.BlockSpec((1, Cout, 1, H, W), lambda n, d: (n, 0, d, 0, 0)),
        ),
        compiler_params=pltpu.CompilerParams(
            dimension_semantics=("parallel", "parallel")),
    )(conv5, scale_b, shift_b)

    return [out]    # SimpleConv3D.forward returns a list with one tensor


# ------------------------------- pure-JAX reference ----------------------------------

def _reference(x, w, b, gamma, beta, eps=1e-5):
    conv = lax.conv_general_dilated(
        x, w, window_strides=(1, 1, 1), padding=((1, 1),) * 3,
        dimension_numbers=("NCDHW", "OIDHW", "NCDHW"))
    conv = conv + b.reshape(1, -1, 1, 1, 1)
    mean = jnp.mean(conv, axis=(0, 2, 3, 4), keepdims=True)
    var = jnp.mean((conv - mean) ** 2, axis=(0, 2, 3, 4), keepdims=True)
    y = (conv - mean) * lax.rsqrt(var + eps)
    y = y * gamma.reshape(1, -1, 1, 1, 1) + beta.reshape(1, -1, 1, 1, 1)
    return jax.nn.gelu(y, approximate=False)


if __name__ == "__main__":
    key = jax.random.PRNGKey(0)
    kx, kw, kb = jax.random.split(key, 3)

    N, Cin, Cout, D, H, W = 2, 4, 8, 8, 8, 8
    x = jax.random.normal(kx, (N, Cin, D, H, W), dtype=jnp.float32)
    # Deterministic synthetic parameters (shapes from nn.Conv3d / nn.BatchNorm3d).
    w = jax.random.normal(kw, (Cout, Cin, 3, 3, 3), dtype=jnp.float32) * 0.1
    b = jax.random.normal(kb, (Cout,), dtype=jnp.float32) * 0.1
    gamma = jnp.ones((Cout,), jnp.float32)    # BatchNorm weight init
    beta = jnp.zeros((Cout,), jnp.float32)    # BatchNorm bias init

    fwd = jax.jit(simple_conv3d_forward)
    outs = fwd(x, w, b, gamma, beta)
    out = jax.block_until_ready(outs[0])
    assert out.shape == (N, Cout, D, H, W), out.shape

    ref = _reference(x, w, b, gamma, beta)
    max_err = float(jnp.max(jnp.abs(out - ref)))
    # bf16 matmul operands + bf16 conv intermediate + tanh-form GELU -> ~1e-2 level error.
    assert jnp.allclose(out, ref, rtol=3e-2, atol=3e-2), max_err
    print("KERNEL_OK")
</pallas_src>

<mosaic_0001>
module attributes {stable_mosaic.version = 11 : i64} {
  func.func @conv_kernel(%arg0: i32, %arg1: i32, %arg2: memref<1x1x4x122xbf16, #tpu.memory_space<vmem>>, %arg3: memref<1x1x4x122xbf16, #tpu.memory_space<vmem>>, %arg4: memref<1x1x4x122xbf16, #tpu.memory_space<vmem>>, %arg5: memref<3x9x8x4xbf16, #tpu.memory_space<vmem>>, %arg6: memref<1x100xf32, #tpu.memory_space<vmem>>, %arg7: memref<1x1x8x100xbf16, #tpu.memory_space<vmem>>, %arg8: memref<1x1x8x1xf32, #tpu.memory_space<vmem>>, %arg9: memref<1x1x8x1xf32, #tpu.memory_space<vmem>>) attributes {dimension_semantics = [#tpu.dimension_semantics<parallel>, #tpu.dimension_semantics<parallel>], iteration_bounds = array<i64: 2, 8>, scalar_prefetch = 0 : i64, scratch_operands = 0 : i64, tpu.core_type = #tpu.core_type<tc>, window_params = [{transform_indices = @transform_0, window_bounds = array<i64: 1, 1, 4, 122>}, {transform_indices = @transform_1, window_bounds = array<i64: 1, 1, 4, 122>}, {transform_indices = @transform_2, window_bounds = array<i64: 1, 1, 4, 122>}, {pipeline_mode = #tpu.pipeline_mode<synchronous>, transform_indices = @transform_3, window_bounds = array<i64: 3, 9, 8, 4>}, {pipeline_mode = #tpu.pipeline_mode<synchronous>, transform_indices = @transform_4, window_bounds = array<i64: 1, 100>}, {transform_indices = @transform_5, window_bounds = array<i64: 1, 1, 8, 100>}, {transform_indices = @transform_6, window_bounds = array<i64: 1, 1, 8, 1>}, {transform_indices = @transform_7, window_bounds = array<i64: 1, 1, 8, 1>}]} {
    %cst = arith.constant 0.000000e+00 : f32
    %0 = vector.broadcast %cst : f32 to vector<8x100xf32>
    %c0 = arith.constant 0 : index
    %c0_0 = arith.constant 0 : index
    %c0_1 = arith.constant 0 : index
    %c0_2 = arith.constant 0 : index
    %1 = vector.load %arg2[%c0, %c0_0, %c0_1, %c0_2] : memref<1x1x4x122xbf16, #tpu.memory_space<vmem>>, vector<1x1x4x122xbf16>
    %2 = vector.shape_cast %1 : vector<1x1x4x122xbf16> to vector<4x122xbf16>
    %3 = vector.extract_strided_slice %2 {offsets = [0, 0], sizes = [4, 100], strides = [1, 1]} : vector<4x122xbf16> to vector<4x100xbf16>
    %c0_3 = arith.constant 0 : index
    %c0_4 = arith.constant 0 : index
    %c0_5 = arith.constant 0 : index
    %c0_6 = arith.constant 0 : index
    %4 = vector.load %arg5[%c0_3, %c0_4, %c0_5, %c0_6] : memref<3x9x8x4xbf16, #tpu.memory_space<vmem>>, vector<1x1x8x4xbf16>
    %5 = vector.shape_cast %4 : vector<1x1x8x4xbf16> to vector<8x4xbf16>
    %cst_7 = arith.constant dense<0.000000e+00> : vector<8x100xf32>
    %6 = tpu.matmul %5, %3, %cst_7 {dimension_numbers = #tpu.dot_dimension_numbers<[1], [0], [0], [1], [0, 0, 1, 1], [], []>} : vector<8x4xbf16>, vector<4x100xbf16>, vector<8x100xf32> -> vector<8x100xf32>
    %7 = arith.addf %0, %6 : vector<8x100xf32>
    %8 = vector.extract_strided_slice %2 {offsets = [0, 1], sizes = [4, 100], strides = [1, 1]} : vector<4x122xbf16> to vector<4x100xbf16>
    %c0_8 = arith.constant 0 : index
    %c1 = arith.constant 1 : index
    %c0_9 = arith.constant 0 : index
    %c0_10 = arith.constant 0 : index
    %9 = vector.load %arg5[%c0_8, %c1, %c0_9, %c0_10] : memref<3x9x8x4xbf16, #tpu.memory_space<vmem>>, vector<1x1x8x4xbf16>
    %10 = vector.shape_cast %9 : vector<1x1x8x4xbf16> to vector<8x4xbf16>
    %cst_11 = arith.constant dense<0.000000e+00> : vector<8x100xf32>
    %11 = tpu.matmul %10, %8, %cst_11 {dimension_numbers = #tpu.dot_dimension_numbers<[1], [0], [0], [1], [0, 0, 1, 1], [], []>} : vector<8x4xbf16>, vector<4x100xbf16>, vector<8x100xf32> -> vector<8x100xf32>
    %12 = arith.addf %7, %11 : vector<8x100xf32>
    %13 = vector.extract_strided_slice %2 {offsets = [0, 2], sizes = [4, 100], strides = [1, 1]} : vector<4x122xbf16> to vector<4x100xbf16>
    %c0_12 = arith.constant 0 : index
    %c2 = arith.constant 2 : index
    %c0_13 = arith.constant 0 : index
    %c0_14 = arith.constant 0 : index
    %14 = vector.load %arg5[%c0_12, %c2, %c0_13, %c0_14] : memref<3x9x8x4xbf16, #tpu.memory_space<vmem>>, vector<1x1x8x4xbf16>
    %15 = vector.shape_cast %14 : vector<1x1x8x4xbf16> to vector<8x4xbf16>
    %cst_15 = arith.constant dense<0.000000e+00> : vector<8x100xf32>
    %16 = tpu.matmul %15, %13, %cst_15 {dimension_numbers = #tpu.dot_dimension_numbers<[1], [0], [0], [1], [0, 0, 1, 1], [], []>} : vector<8x4xbf16>, vector<4x100xbf16>, vector<8x100xf32> -> vector<8x100xf32>
    %17 = arith.addf %12, %16 : vector<8x100xf32>
    %18 = vector.extract_strided_slice %2 {offsets = [0, 10], sizes = [4, 100], strides = [1, 1]} : vector<4x122xbf16> to vector<4x100xbf16>
    %c0_16 = arith.constant 0 : index
    %c3 = arith.constant 3 : index
    %c0_17 = arith.constant 0 : index
    %c0_18 = arith.constant 0 : index
    %19 = vector.load %arg5[%c0_16, %c3, %c0_17, %c0_18] : memref<3x9x8x4xbf16, #tpu.memory_space<vmem>>, vector<1x1x8x4xbf16>
    %20 = vector.shape_cast %19 : vector<1x1x8x4xbf16> to vector<8x4xbf16>
    %cst_19 = arith.constant dense<0.000000e+00> : vector<8x100xf32>
    %21 = tpu.matmul %20, %18, %cst_19 {dimension_numbers = #tpu.dot_dimension_numbers<[1], [0], [0], [1], [0, 0, 1, 1], [], []>} : vector<8x4xbf16>, vector<4x100xbf16>, vector<8x100xf32> -> vector<8x100xf32>
    %22 = arith.addf %17, %21 : vector<8x100xf32>
    %23 = vector.extract_strided_slice %2 {offsets = [0, 11], sizes = [4, 100], strides = [1, 1]} : vector<4x122xbf16> to vector<4x100xbf16>
    %c0_20 = arith.constant 0 : index
    %c4 = arith.constant 4 : index
    %c0_21 = arith.constant 0 : index
    %c0_22 = arith.constant 0 : index
    %24 = vector.load %arg5[%c0_20, %c4, %c0_21, %c0_22] : memref<3x9x8x4xbf16, #tpu.memory_space<vmem>>, vector<1x1x8x4xbf16>
    %25 = vector.shape_cast %24 : vector<1x1x8x4xbf16> to vector<8x4xbf16>
    %cst_23 = arith.constant dense<0.000000e+00> : vector<8x100xf32>
    %26 = tpu.matmul %25, %23, %cst_23 {dimension_numbers = #tpu.dot_dimension_numbers<[1], [0], [0], [1], [0, 0, 1, 1], [], []>} : vector<8x4xbf16>, vector<4x100xbf16>, vector<8x100xf32> -> vector<8x100xf32>
    %27 = arith.addf %22, %26 : vector<8x100xf32>
    %28 = vector.extract_strided_slice %2 {offsets = [0, 12], sizes = [4, 100], strides = [1, 1]} : vector<4x122xbf16> to vector<4x100xbf16>
    %c0_24 = arith.constant 0 : index
    %c5 = arith.constant 5 : index
    %c0_25 = arith.constant 0 : index
    %c0_26 = arith.constant 0 : index
    %29 = vector.load %arg5[%c0_24, %c5, %c0_25, %c0_26] : memref<3x9x8x4xbf16, #tpu.memory_space<vmem>>, vector<1x1x8x4xbf16>
    %30 = vector.shape_cast %29 : vector<1x1x8x4xbf16> to vector<8x4xbf16>
    %cst_27 = arith.constant dense<0.000000e+00> : vector<8x100xf32>
    %31 = tpu.matmul %30, %28, %cst_27 {dimension_numbers = #tpu.dot_dimension_numbers<[1], [0], [0], [1], [0, 0, 1, 1], [], []>} : vector<8x4xbf16>, vector<4x100xbf16>, vector<8x100xf32> -> vector<8x100xf32>
    %32 = arith.addf %27, %31 : vector<8x100xf32>
    %33 = vector.extract_strided_slice %2 {offsets = [0, 20], sizes = [4, 100], strides = [1, 1]} : vector<4x122xbf16> to vector<4x100xbf16>
    %c0_28 = arith.constant 0 : index
    %c6 = arith.constant 6 : index
    %c0_29 = arith.constant 0 : index
    %c0_30 = arith.constant 0 : index
    %34 = vector.load %arg5[%c0_28, %c6, %c0_29, %c0_30] : memref<3x9x8x4xbf16, #tpu.memory_space<vmem>>, vector<1x1x8x4xbf16>
    %35 = vector.shape_cast %34 : vector<1x1x8x4xbf16> to vector<8x4xbf16>
    %cst_31 = arith.constant dense<0.000000e+00> : vector<8x100xf32>
    %36 = tpu.matmul %35, %33, %cst_31 {dimension_numbers = #tpu.dot_dimension_numbers<[1], [0], [0], [1], [0, 0, 1, 1], [], []>} : vector<8x4xbf16>, vector<4x100xbf16>, vector<8x100xf32> -> vector<8x100xf32>
    %37 = arith.addf %32, %36 : vector<8x100xf32>
    %38 = vector.extract_strided_slice %2 {offsets = [0, 21], sizes = [4, 100], strides = [1, 1]} : vector<4x122xbf16> to vector<4x100xbf16>
    %c0_32 = arith.constant 0 : index
    %c7 = arith.constant 7 : index
    %c0_33 = arith.constant 0 : index
    %c0_34 = arith.constant 0 : index
    %39 = vector.load %arg5[%c0_32, %c7, %c0_33, %c0_34] : memref<3x9x8x4xbf16, #tpu.memory_space<vmem>>, vector<1x1x8x4xbf16>
    %40 = vector.shape_cast %39 : vector<1x1x8x4xbf16> to vector<8x4xbf16>
    %cst_35 = arith.constant dense<0.000000e+00> : vector<8x100xf32>
    %41 = tpu.matmul %40, %38, %cst_35 {dimension_numbers = #tpu.dot_dimension_numbers<[1], [0], [0], [1], [0, 0, 1, 1], [], []>} : vector<8x4xbf16>, vector<4x100xbf16>, vector<8x100xf32> -> vector<8x100xf32>
    %42 = arith.addf %37, %41 : vector<8x100xf32>
    %43 = vector.extract_strided_slice %2 {offsets = [0, 22], sizes = [4, 100], strides = [1, 1]} : vector<4x122xbf16> to vector<4x100xbf16>
    %c0_36 = arith.constant 0 : index
    %c8 = arith.constant 8 : index
    %c0_37 = arith.constant 0 : index
    %c0_38 = arith.constant 0 : index
    %44 = vector.load %arg5[%c0_36, %c8, %c0_37, %c0_38] : memref<3x9x8x4xbf16, #tpu.memory_space<vmem>>, vector<1x1x8x4xbf16>
    %45 = vector.shape_cast %44 : vector<1x1x8x4xbf16> to vector<8x4xbf16>
    %cst_39 = arith.constant dense<0.000000e+00> : vector<8x100xf32>
    %46 = tpu.matmul %45, %43, %cst_39 {dimension_numbers = #tpu.dot_dimension_numbers<[1], [0], [0], [1], [0, 0, 1, 1], [], []>} : vector<8x4xbf16>, vector<4x100xbf16>, vector<8x100xf32> -> vector<8x100xf32>
    %47 = arith.addf %42, %46 : vector<8x100xf32>
    %c0_40 = arith.constant 0 : index
    %c0_41 = arith.constant 0 : index
    %c0_42 = arith.constant 0 : index
    %c0_43 = arith.constant 0 : index
    %48 = vector.load %arg3[%c0_40, %c0_41, %c0_42, %c0_43] : memref<1x1x4x122xbf16, #tpu.memory_space<vmem>>, vector<1x1x4x122xbf16>
    %49 = vector.shape_cast %48 : vector<1x1x4x122xbf16> to vector<4x122xbf16>
    %50 = vector.extract_strided_slice %49 {offsets = [0, 0], sizes = [4, 100], strides = [1, 1]} : vector<4x122xbf16> to vector<4x100xbf16>
    %c1_44 = arith.constant 1 : index
    %c0_45 = arith.constant 0 : index
    %c0_46 = arith.constant 0 : index
    %c0_47 = arith.constant 0 : index
    %51 = vector.load %arg5[%c1_44, %c0_45, %c0_46, %c0_47] : memref<3x9x8x4xbf16, #tpu.memory_space<vmem>>, vector<1x1x8x4xbf16>
    %52 = vector.shape_cast %51 : vector<1x1x8x4xbf16> to vector<8x4xbf16>
    %cst_48 = arith.constant dense<0.000000e+00> : vector<8x100xf32>
    %53 = tpu.matmul %52, %50, %cst_48 {dimension_numbers = #tpu.dot_dimension_numbers<[1], [0], [0], [1], [0, 0, 1, 1], [], []>} : vector<8x4xbf16>, vector<4x100xbf16>, vector<8x100xf32> -> vector<8x100xf32>
    %54 = arith.addf %47, %53 : vector<8x100xf32>
    %55 = vector.extract_strided_slice %49 {offsets = [0, 1], sizes = [4, 100], strides = [1, 1]} : vector<4x122xbf16> to vector<4x100xbf16>
    %c1_49 = arith.constant 1 : index
    %c1_50 = arith.constant 1 : index
    %c0_51 = arith.constant 0 : index
    %c0_52 = arith.constant 0 : index
    %56 = vector.load %arg5[%c1_49, %c1_50, %c0_51, %c0_52] : memref<3x9x8x4xbf16, #tpu.memory_space<vmem>>, vector<1x1x8x4xbf16>
    %57 = vector.shape_cast %56 : vector<1x1x8x4xbf16> to vector<8x4xbf16>
    %cst_53 = arith.constant dense<0.000000e+00> : vector<8x100xf32>
    %58 = tpu.matmul %57, %55, %cst_53 {dimension_numbers = #tpu.dot_dimension_numbers<[1], [0], [0], [1], [0, 0, 1, 1], [], []>} : vector<8x4xbf16>, vector<4x100xbf16>, vector<8x100xf32> -> vector<8x100xf32>
    %59 = arith.addf %54, %58 : vector<8x100xf32>
    %60 = vector.extract_strided_slice %49 {offsets = [0, 2], sizes = [4, 100], strides = [1, 1]} : vector<4x122xbf16> to vector<4x100xbf16>
    %c1_54 = arith.constant 1 : index
    %c2_55 = arith.constant 2 : index
    %c0_56 = arith.constant 0 : index
    %c0_57 = arith.constant 0 : index
    %61 = vector.load %arg5[%c1_54, %c2_55, %c0_56, %c0_57] : memref<3x9x8x4xbf16, #tpu.memory_space<vmem>>, vector<1x1x8x4xbf16>
    %62 = vector.shape_cast %61 : vector<1x1x8x4xbf16> to vector<8x4xbf16>
    %cst_58 = arith.constant dense<0.000000e+00> : vector<8x100xf32>
    %63 = tpu.matmul %62, %60, %cst_58 {dimension_numbers = #tpu.dot_dimension_numbers<[1], [0], [0], [1], [0, 0, 1, 1], [], []>} : vector<8x4xbf16>, vector<4x100xbf16>, vector<8x100xf32> -> vector<8x100xf32>
    %64 = arith.addf %59, %63 : vector<8x100xf32>
    %65 = vector.extract_strided_slice %49 {offsets = [0, 10], sizes = [4, 100], strides = [1, 1]} : vector<4x122xbf16> to vector<4x100xbf16>
    %c1_59 = arith.constant 1 : index
    %c3_60 = arith.constant 3 : index
    %c0_61 = arith.constant 0 : index
    %c0_62 = arith.constant 0 : index
    %66 = vector.load %arg5[%c1_59, %c3_60, %c0_61, %c0_62] : memref<3x9x8x4xbf16, #tpu.memory_space<vmem>>, vector<1x1x8x4xbf16>
    %67 = vector.shape_cast %66 : vector<1x1x8x4xbf16> to vector<8x4xbf16>
    %cst_63 = arith.constant dense<0.000000e+00> : vector<8x100xf32>
    %68 = tpu.matmul %67, %65, %cst_63 {dimension_numbers = #tpu.dot_dimension_numbers<[1], [0], [0], [1], [0, 0, 1, 1], [], []>} : vector<8x4xbf16>, vector<4x100xbf16>, vector<8x100xf32> -> vector<8x100xf32>
    %69 = arith.addf %64, %68 : vector<8x100xf32>
    %70 = vector.extract_strided_slice %49 {offsets = [0, 11], sizes = [4, 100], strides = [1, 1]} : vector<4x122xbf16> to vector<4x100xbf16>
    %c1_64 = arith.constant 1 : index
    %c4_65 = arith.constant 4 : index
    %c0_66 = arith.constant 0 : index
    %c0_67 = arith.constant 0 : index
    %71 = vector.load %arg5[%c1_64, %c4_65, %c0_66, %c0_67] : memref<3x9x8x4xbf16, #tpu.memory_space<vmem>>, vector<1x1x8x4xbf16>
    %72 = vector.shape_cast %71 : vector<1x1x8x4xbf16> to vector<8x4xbf16>
    %cst_68 = arith.constant dense<0.000000e+00> : vector<8x100xf32>
    %73 = tpu.matmul %72, %70, %cst_68 {dimension_numbers = #tpu.dot_dimension_numbers<[1], [0], [0], [1], [0, 0, 1, 1], [], []>} : vector<8x4xbf16>, vector<4x100xbf16>, vector<8x100xf32> -> vector<8x100xf32>
    %74 = arith.addf %69, %73 : vector<8x100xf32>
    %75 = vector.extract_strided_slice %49 {offsets = [0, 12], sizes = [4, 100], strides = [1, 1]} : vector<4x122xbf16> to vector<4x100xbf16>
    %c1_69 = arith.constant 1 : index
    %c5_70 = arith.constant 5 : index
    %c0_71 = arith.constant 0 : index
    %c0_72 = arith.constant 0 : index
    %76 = vector.load %arg5[%c1_69, %c5_70, %c0_71, %c0_72] : memref<3x9x8x4xbf16, #tpu.memory_space<vmem>>, vector<1x1x8x4xbf16>
    %77 = vector.shape_cast %76 : vector<1x1x8x4xbf16> to vector<8x4xbf16>
    %cst_73 = arith.constant dense<0.000000e+00> : vector<8x100xf32>
    %78 = tpu.matmul %77, %75, %cst_73 {dimension_numbers = #tpu.dot_dimension_numbers<[1], [0], [0], [1], [0, 0, 1, 1], [], []>} : vector<8x4xbf16>, vector<4x100xbf16>, vector<8x100xf32> -> vector<8x100xf32>
    %79 = arith.addf %74, %78 : vector<8x100xf32>
    %80 = vector.extract_strided_slice %49 {offsets = [0, 20], sizes = [4, 100], strides = [1, 1]} : vector<4x122xbf16> to vector<4x100xbf16>
    %c1_74 = arith.constant 1 : index
    %c6_75 = arith.constant 6 : index
    %c0_76 = arith.constant 0 : index
    %c0_77 = arith.constant 0 : index
    %81 = vector.load %arg5[%c1_74, %c6_75, %c0_76, %c0_77] : memref<3x9x8x4xbf16, #tpu.memory_space<vmem>>, vector<1x1x8x4xbf16>
    %82 = vector.shape_cast %81 : vector<1x1x8x4xbf16> to vector<8x4xbf16>
    %cst_78 = arith.constant dense<0.000000e+00> : vector<8x100xf32>
    %83 = tpu.matmul %82, %80, %cst_78 {dimension_numbers = #tpu.dot_dimension_numbers<[1], [0], [0], [1], [0, 0, 1, 1], [], []>} : vector<8x4xbf16>, vector<4x100xbf16>, vector<8x100xf32> -> vector<8x100xf32>
    %84 = arith.addf %79, %83 : vector<8x100xf32>
    %85 = vector.extract_strided_slice %49 {offsets = [0, 21], sizes = [4, 100], strides = [1, 1]} : vector<4x122xbf16> to vector<4x100xbf16>
    %c1_79 = arith.constant 1 : index
    %c7_80 = arith.constant 7 : index
    %c0_81 = arith.constant 0 : index
    %c0_82 = arith.constant 0 : index
    %86 = vector.load %arg5[%c1_79, %c7_80, %c0_81, %c0_82] : memref<3x9x8x4xbf16, #tpu.memory_space<vmem>>, vector<1x1x8x4xbf16>
    %87 = vector.shape_cast %86 : vector<1x1x8x4xbf16> to vector<8x4xbf16>
    %cst_83 = arith.constant dense<0.000000e+00> : vector<8x100xf32>
    %88 = tpu.matmul %87, %85, %cst_83 {dimension_numbers = #tpu.dot_dimension_numbers<[1], [0], [0], [1], [0, 0, 1, 1], [], []>} : vector<8x4xbf16>, vector<4x100xbf16>, vector<8x100xf32> -> vector<8x100xf32>
    %89 = arith.addf %84, %88 : vector<8x100xf32>
    %90 = vector.extract_strided_slice %49 {offsets = [0, 22], sizes = [4, 100], strides = [1, 1]} : vector<4x122xbf16> to vector<4x100xbf16>
    %c1_84 = arith.constant 1 : index
    %c8_85 = arith.constant 8 : index
    %c0_86 = arith.constant 0 : index
    %c0_87 = arith.constant 0 : index
    %91 = vector.load %arg5[%c1_84, %c8_85, %c0_86, %c0_87] : memref<3x9x8x4xbf16, #tpu.memory_space<vmem>>, vector<1x1x8x4xbf16>
    %92 = vector.shape_cast %91 : vector<1x1x8x4xbf16> to vector<8x4xbf16>
    %cst_88 = arith.constant dense<0.000000e+00> : vector<8x100xf32>
    %93 = tpu.matmul %92, %90, %cst_88 {dimension_numbers = #tpu.dot_dimension_numbers<[1], [0], [0], [1], [0, 0, 1, 1], [], []>} : vector<8x4xbf16>, vector<4x100xbf16>, vector<8x100xf32> -> vector<8x100xf32>
    %94 = arith.addf %89, %93 : vector<8x100xf32>
    %c0_89 = arith.constant 0 : index
    %c0_90 = arith.constant 0 : index
    %c0_91 = arith.constant 0 : index
    %c0_92 = arith.constant 0 : index
    %95 = vector.load %arg4[%c0_89, %c0_90, %c0_91, %c0_92] : memref<1x1x4x122xbf16, #tpu.memory_space<vmem>>, vector<1x1x4x122xbf16>
    %96 = vector.shape_cast %95 : vector<1x1x4x122xbf16> to vector<4x122xbf16>
    %97 = vector.extract_strided_slice %96 {offsets = [0, 0], sizes = [4, 100], strides = [1, 1]} : vector<4x122xbf16> to vector<4x100xbf16>
    %c2_93 = arith.constant 2 : index
    %c0_94 = arith.constant 0 : index
    %c0_95 = arith.constant 0 : index
    %c0_96 = arith.constant 0 : index
    %98 = vector.load %arg5[%c2_93, %c0_94, %c0_95, %c0_96] : memref<3x9x8x4xbf16, #tpu.memory_space<vmem>>, vector<1x1x8x4xbf16>
    %99 = vector.shape_cast %98 : vector<1x1x8x4xbf16> to vector<8x4xbf16>
    %cst_97 = arith.constant dense<0.000000e+00> : vector<8x100xf32>
    %100 = tpu.matmul %99, %97, %cst_97 {dimension_numbers = #tpu.dot_dimension_numbers<[1], [0], [0], [1], [0, 0, 1, 1], [], []>} : vector<8x4xbf16>, vector<4x100xbf16>, vector<8x100xf32> -> vector<8x100xf32>
    %101 = arith.addf %94, %100 : vector<8x100xf32>
    %102 = vector.extract_strided_slice %96 {offsets = [0, 1], sizes = [4, 100], strides = [1, 1]} : vector<4x122xbf16> to vector<4x100xbf16>
    %c2_98 = arith.constant 2 : index
    %c1_99 = arith.constant 1 : index
    %c0_100 = arith.constant 0 : index
    %c0_101 = arith.constant 0 : index
    %103 = vector.load %arg5[%c2_98, %c1_99, %c0_100, %c0_101] : memref<3x9x8x4xbf16, #tpu.memory_space<vmem>>, vector<1x1x8x4xbf16>
    %104 = vector.shape_cast %103 : vector<1x1x8x4xbf16> to vector<8x4xbf16>
    %cst_102 = arith.constant dense<0.000000e+00> : vector<8x100xf32>
    %105 = tpu.matmul %104, %102, %cst_102 {dimension_numbers = #tpu.dot_dimension_numbers<[1], [0], [0], [1], [0, 0, 1, 1], [], []>} : vector<8x4xbf16>, vector<4x100xbf16>, vector<8x100xf32> -> vector<8x100xf32>
    %106 = arith.addf %101, %105 : vector<8x100xf32>
    %107 = vector.extract_strided_slice %96 {offsets = [0, 2], sizes = [4, 100], strides = [1, 1]} : vector<4x122xbf16> to vector<4x100xbf16>
    %c2_103 = arith.constant 2 : index
    %c2_104 = arith.constant 2 : index
    %c0_105 = arith.constant 0 : index
    %c0_106 = arith.constant 0 : index
    %108 = vector.load %arg5[%c2_103, %c2_104, %c0_105, %c0_106] : memref<3x9x8x4xbf16, #tpu.memory_space<vmem>>, vector<1x1x8x4xbf16>
    %109 = vector.shape_cast %108 : vector<1x1x8x4xbf16> to vector<8x4xbf16>
    %cst_107 = arith.constant dense<0.000000e+00> : vector<8x100xf32>
    %110 = tpu.matmul %109, %107, %cst_107 {dimension_numbers = #tpu.dot_dimension_numbers<[1], [0], [0], [1], [0, 0, 1, 1], [], []>} : vector<8x4xbf16>, vector<4x100xbf16>, vector<8x100xf32> -> vector<8x100xf32>
    %111 = arith.addf %106, %110 : vector<8x100xf32>
    %112 = vector.extract_strided_slice %96 {offsets = [0, 10], sizes = [4, 100], strides = [1, 1]} : vector<4x122xbf16> to vector<4x100xbf16>
    %c2_108 = arith.constant 2 : index
    %c3_109 = arith.constant 3 : index
    %c0_110 = arith.constant 0 : index
    %c0_111 = arith.constant 0 : index
    %113 = vector.load %arg5[%c2_108, %c3_109, %c0_110, %c0_111] : memref<3x9x8x4xbf16, #tpu.memory_space<vmem>>, vector<1x1x8x4xbf16>
    %114 = vector.shape_cast %113 : vector<1x1x8x4xbf16> to vector<8x4xbf16>
    %cst_112 = arith.constant dense<0.000000e+00> : vector<8x100xf32>
    %115 = tpu.matmul %114, %112, %cst_112 {dimension_numbers = #tpu.dot_dimension_numbers<[1], [0], [0], [1], [0, 0, 1, 1], [], []>} : vector<8x4xbf16>, vector<4x100xbf16>, vector<8x100xf32> -> vector<8x100xf32>
    %116 = arith.addf %111, %115 : vector<8x100xf32>
    %117 = vector.extract_strided_slice %96 {offsets = [0, 11], sizes = [4, 100], strides = [1, 1]} : vector<4x122xbf16> to vector<4x100xbf16>
    %c2_113 = arith.constant 2 : index
    %c4_114 = arith.constant 4 : index
    %c0_115 = arith.constant 0 : index
    %c0_116 = arith.constant 0 : index
    %118 = vector.load %arg5[%c2_113, %c4_114, %c0_115, %c0_116] : memref<3x9x8x4xbf16, #tpu.memory_space<vmem>>, vector<1x1x8x4xbf16>
    %119 = vector.shape_cast %118 : vector<1x1x8x4xbf16> to vector<8x4xbf16>
    %cst_117 = arith.constant dense<0.000000e+00> : vector<8x100xf32>
    %120 = tpu.matmul %119, %117, %cst_117 {dimension_numbers = #tpu.dot_dimension_numbers<[1], [0], [0], [1], [0, 0, 1, 1], [], []>} : vector<8x4xbf16>, vector<4x100xbf16>, vector<8x100xf32> -> vector<8x100xf32>
    %121 = arith.addf %116, %120 : vector<8x100xf32>
    %122 = vector.extract_strided_slice %96 {offsets = [0, 12], sizes = [4, 100], strides = [1, 1]} : vector<4x122xbf16> to vector<4x100xbf16>
    %c2_118 = arith.constant 2 : index
    %c5_119 = arith.constant 5 : index
    %c0_120 = arith.constant 0 : index
    %c0_121 = arith.constant 0 : index
    %123 = vector.load %arg5[%c2_118, %c5_119, %c0_120, %c0_121] : memref<3x9x8x4xbf16, #tpu.memory_space<vmem>>, vector<1x1x8x4xbf16>
    %124 = vector.shape_cast %123 : vector<1x1x8x4xbf16> to vector<8x4xbf16>
    %cst_122 = arith.constant dense<0.000000e+00> : vector<8x100xf32>
    %125 = tpu.matmul %124, %122, %cst_122 {dimension_numbers = #tpu.dot_dimension_numbers<[1], [0], [0], [1], [0, 0, 1, 1], [], []>} : vector<8x4xbf16>, vector<4x100xbf16>, vector<8x100xf32> -> vector<8x100xf32>
    %126 = arith.addf %121, %125 : vector<8x100xf32>
    %127 = vector.extract_strided_slice %96 {offsets = [0, 20], sizes = [4, 100], strides = [1, 1]} : vector<4x122xbf16> to vector<4x100xbf16>
    %c2_123 = arith.constant 2 : index
    %c6_124 = arith.constant 6 : index
    %c0_125 = arith.constant 0 : index
    %c0_126 = arith.constant 0 : index
    %128 = vector.load %arg5[%c2_123, %c6_124, %c0_125, %c0_126] : memref<3x9x8x4xbf16, #tpu.memory_space<vmem>>, vector<1x1x8x4xbf16>
    %129 = vector.shape_cast %128 : vector<1x1x8x4xbf16> to vector<8x4xbf16>
    %cst_127 = arith.constant dense<0.000000e+00> : vector<8x100xf32>
    %130 = tpu.matmul %129, %127, %cst_127 {dimension_numbers = #tpu.dot_dimension_numbers<[1], [0], [0], [1], [0, 0, 1, 1], [], []>} : vector<8x4xbf16>, vector<4x100xbf16>, vector<8x100xf32> -> vector<8x100xf32>
    %131 = arith.addf %126, %130 : vector<8x100xf32>
    %132 = vector.extract_strided_slice %96 {offsets = [0, 21], sizes = [4, 100], strides = [1, 1]} : vector<4x122xbf16> to vector<4x100xbf16>
    %c2_128 = arith.constant 2 : index
    %c7_129 = arith.constant 7 : index
    %c0_130 = arith.constant 0 : index
    %c0_131 = arith.constant 0 : index
    %133 = vector.load %arg5[%c2_128, %c7_129, %c0_130, %c0_131] : memref<3x9x8x4xbf16, #tpu.memory_space<vmem>>, vector<1x1x8x4xbf16>
    %134 = vector.shape_cast %133 : vector<1x1x8x4xbf16> to vector<8x4xbf16>
    %cst_132 = arith.constant dense<0.000000e+00> : vector<8x100xf32>
    %135 = tpu.matmul %134, %132, %cst_132 {dimension_numbers = #tpu.dot_dimension_numbers<[1], [0], [0], [1], [0, 0, 1, 1], [], []>} : vector<8x4xbf16>, vector<4x100xbf16>, vector<8x100xf32> -> vector<8x100xf32>
    %136 = arith.addf %131, %135 : vector<8x100xf32>
    %137 = vector.extract_strided_slice %96 {offsets = [0, 22], sizes = [4, 100], strides = [1, 1]} : vector<4x122xbf16> to vector<4x100xbf16>
    %c2_133 = arith.constant 2 : index
    %c8_134 = arith.constant 8 : index
    %c0_135 = arith.constant 0 : index
    %c0_136 = arith.constant 0 : index
    %138 = vector.load %arg5[%c2_133, %c8_134, %c0_135, %c0_136] : memref<3x9x8x4xbf16, #tpu.memory_space<vmem>>, vector<1x1x8x4xbf16>
    %139 = vector.shape_cast %138 : vector<1x1x8x4xbf16> to vector<8x4xbf16>
    %cst_137 = arith.constant dense<0.000000e+00> : vector<8x100xf32>
    %140 = tpu.matmul %139, %137, %cst_137 {dimension_numbers = #tpu.dot_dimension_numbers<[1], [0], [0], [1], [0, 0, 1, 1], [], []>} : vector<8x4xbf16>, vector<4x100xbf16>, vector<8x100xf32> -> vector<8x100xf32>
    %141 = arith.addf %136, %140 : vector<8x100xf32>
    %142 = arith.truncf %141 : vector<8x100xf32> to vector<8x100xbf16>
    %143 = vector.shape_cast %142 : vector<8x100xbf16> to vector<1x1x8x100xbf16>
    %c0_138 = arith.constant 0 : index
    %c0_139 = arith.constant 0 : index
    %c0_140 = arith.constant 0 : index
    %c0_141 = arith.constant 0 : index
    %144 = vector.load %arg7[%c0_138, %c0_139, %c0_140, %c0_141] : memref<1x1x8x100xbf16, #tpu.memory_space<vmem>>, vector<1x1x8x100xbf16>
    tpu.vector_store %arg7[%c0_138, %c0_139, %c0_140, %c0_141], %143 {strides = array<i32>} : memref<1x1x8x100xbf16, #tpu.memory_space<vmem>>, vector<1x1x8x100xbf16>,
    %c0_142 = arith.constant 0 : index
    %c0_143 = arith.constant 0 : index
    %145 = vector.load %arg6[%c0_142, %c0_143] : memref<1x100xf32, #tpu.memory_space<vmem>>, vector<1x100xf32>
    %146 = vector.broadcast %145 : vector<1x100xf32> to vector<8x100xf32>
    %147 = arith.mulf %141, %146 : vector<8x100xf32>
    %cst_144 = arith.constant dense<0.000000e+00> : vector<8xf32>
    %148 = vector.multi_reduction <add>, %147, %cst_144 [1] : vector<8x100xf32> to vector<8xf32>
    %149 = vector.shape_cast %148 : vector<8xf32> to vector<8x1xf32>
    %150 = vector.shape_cast %149 : vector<8x1xf32> to vector<1x1x8x1xf32>
    %c0_145 = arith.constant 0 : index
    %c0_146 = arith.constant 0 : index
    %c0_147 = arith.constant 0 : index
    %c0_148 = arith.constant 0 : index
    %151 = vector.load %arg8[%c0_145, %c0_146, %c0_147, %c0_148] : memref<1x1x8x1xf32, #tpu.memory_space<vmem>>, vector<1x1x8x1xf32>
    tpu.vector_store %arg8[%c0_145, %c0_146, %c0_147, %c0_148], %150 {strides = array<i32>} : memref<1x1x8x1xf32, #tpu.memory_space<vmem>>, vector<1x1x8x1xf32>,
    %152 = arith.mulf %141, %141 : vector<8x100xf32>
    %153 = vector.broadcast %145 : vector<1x100xf32> to vector<8x100xf32>
    %154 = arith.mulf %152, %153 : vector<8x100xf32>
    %cst_149 = arith.constant dense<0.000000e+00> : vector<8xf32>
    %155 = vector.multi_reduction <add>, %154, %cst_149 [1] : vector<8x100xf32> to vector<8xf32>
    %156 = vector.shape_cast %155 : vector<8xf32> to vector<8x1xf32>
    %157 = vector.shape_cast %156 : vector<8x1xf32> to vector<1x1x8x1xf32>
    %c0_150 = arith.constant 0 : index
    %c0_151 = arith.constant 0 : index
    %c0_152 = arith.constant 0 : index
    %c0_153 = arith.constant 0 : index
    %158 = vector.load %arg9[%c0_150, %c0_151, %c0_152, %c0_153] : memref<1x1x8x1xf32, #tpu.memory_space<vmem>>, vector<1x1x8x1xf32>
    tpu.vector_store %arg9[%c0_150, %c0_151, %c0_152, %c0_153], %157 {strides = array<i32>} : memref<1x1x8x1xf32, #tpu.memory_space<vmem>>, vector<1x1x8x1xf32>,
    return
  }
  func.func @transform_0(%arg0: i32, %arg1: i32) -> (i32, i32, i32, i32) {
    %c0_i32 = arith.constant 0 : i32
    %c0_i32_0 = arith.constant 0 : i32
    %c0_i32_1 = arith.constant 0 : i32
    return %arg0, %arg1, %c0_i32, %c0_i32_0 : i32, i32, i32, i32
  }
  func.func @transform_1(%arg0: i32, %arg1: i32) -> (i32, i32, i32, i32) {
    %c1_i32 = arith.constant 1 : i32
    %0 = arith.addi %arg1, %c1_i32 : i32
    %c0_i32 = arith.constant 0 : i32
    %c0_i32_0 = arith.constant 0 : i32
    %c0_i32_1 = arith.constant 0 : i32
    return %arg0, %0, %c0_i32, %c0_i32_0 : i32, i32, i32, i32
  }
  func.func @transform_2(%arg0: i32, %arg1: i32) -> (i32, i32, i32, i32) {
    %c2_i32 = arith.constant 2 : i32
    %0 = arith.addi %arg1, %c2_i32 : i32
    %c0_i32 = arith.constant 0 : i32
    %c0_i32_0 = arith.constant 0 : i32
    %c0_i32_1 = arith.constant 0 : i32
    return %arg0, %0, %c0_i32, %c0_i32_0 : i32, i32, i32, i32
  }
  func.func @transform_3(%arg0: i32, %arg1: i32) -> (i32, i32, i32, i32) {
    %c0_i32 = arith.constant 0 : i32
    %c0_i32_0 = arith.constant 0 : i32
    %c0_i32_1 = arith.constant 0 : i32
    %c0_i32_2 = arith.constant 0 : i32
    %c0_i32_3 = arith.constant 0 : i32
    return %c0_i32, %c0_i32_0, %c0_i32_1, %c0_i32_2 : i32, i32, i32, i32
  }
  func.func @transform_4(%arg0: i32, %arg1: i32) -> (i32, i32) {
    %c0_i32 = arith.constant 0 : i32
    %c0_i32_0 = arith.constant 0 : i32
    %c0_i32_1 = arith.constant 0 : i32
    return %c0_i32, %c0_i32_0 : i32, i32
  }
  func.func @transform_5(%arg0: i32, %arg1: i32) -> (i32, i32, i32, i32) {
    %c0_i32 = arith.constant 0 : i32
    %c0_i32_0 = arith.constant 0 : i32
    %c0_i32_1 = arith.constant 0 : i32
    return %arg0, %arg1, %c0_i32, %c0_i32_0 : i32, i32, i32, i32
  }
  func.func @transform_6(%arg0: i32, %arg1: i32) -> (i32, i32, i32, i32) {
    %c0_i32 = arith.constant 0 : i32
    %c0_i32_0 = arith.constant 0 : i32
    %c0_i32_1 = arith.constant 0 : i32
    return %arg0, %arg1, %c0_i32, %c0_i32_0 : i32, i32, i32, i32
  }
  func.func @transform_7(%arg0: i32, %arg1: i32) -> (i32, i32, i32, i32) {
    %c0_i32 = arith.constant 0 : i32
    %c0_i32_0 = arith.constant 0 : i32
    %c0_i32_1 = arith.constant 0 : i32
    return %arg0, %arg1, %c0_i32, %c0_i32_0 : i32, i32, i32, i32
  }
}

module attributes {stable_mosaic.version = 11 : i64} {
  func.func @bn_gelu_kernel(%arg0: i32, %arg1: i32, %arg2: memref<1x1x8x10x10xbf16, #tpu.memory_space<vmem>>, %arg3: memref<1x8x10x10xf32, #tpu.memory_space<vmem>>, %arg4: memref<1x8x10x10xf32, #tpu.memory_space<vmem>>, %arg5: memref<1x8x1x8x8xf32, #tpu.memory_space<vmem>>) attributes {dimension_semantics = [#tpu.dimension_semantics<parallel>, #tpu.dimension_semantics<parallel>], iteration_bounds = array<i64: 2, 8>, scalar_prefetch = 0 : i64, scratch_operands = 0 : i64, tpu.core_type = #tpu.core_type<tc>, window_params = [{transform_indices = @transform_0, window_bounds = array<i64: 1, 1, 8, 10, 10>}, {pipeline_mode = #tpu.pipeline_mode<synchronous>, transform_indices = @transform_1, window_bounds = array<i64: 1, 8, 10, 10>}, {pipeline_mode = #tpu.pipeline_mode<synchronous>, transform_indices = @transform_2, window_bounds = array<i64: 1, 8, 10, 10>}, {transform_indices = @transform_3, window_bounds = array<i64: 1, 8, 1, 8, 8>}]} {
    %c0 = arith.constant 0 : index
    %c0_0 = arith.constant 0 : index
    %c0_1 = arith.constant 0 : index
    %c0_2 = arith.constant 0 : index
    %c0_3 = arith.constant 0 : index
    %0 = vector.load %arg2[%c0, %c0_0, %c0_1, %c0_2, %c0_3] : memref<1x1x8x10x10xbf16, #tpu.memory_space<vmem>>, vector<1x1x8x10x10xbf16>
    %1 = vector.shape_cast %0 : vector<1x1x8x10x10xbf16> to vector<8x10x10xbf16>
    %2 = arith.extf %1 : vector<8x10x10xbf16> to vector<8x10x10xf32>
    %c0_4 = arith.constant 0 : index
    %c0_5 = arith.constant 0 : index
    %c0_6 = arith.constant 0 : index
    %c0_7 = arith.constant 0 : index
    %3 = vector.load %arg3[%c0_4, %c0_5, %c0_6, %c0_7] : memref<1x8x10x10xf32, #tpu.memory_space<vmem>>, vector<1x8x10x10xf32>
    %4 = vector.shape_cast %3 : vector<1x8x10x10xf32> to vector<8x10x10xf32>
    %5 = arith.mulf %2, %4 : vector<8x10x10xf32>
    %c0_8 = arith.constant 0 : index
    %c0_9 = arith.constant 0 : index
    %c0_10 = arith.constant 0 : index
    %c0_11 = arith.constant 0 : index
    %6 = vector.load %arg4[%c0_8, %c0_9, %c0_10, %c0_11] : memref<1x8x10x10xf32, #tpu.memory_space<vmem>>, vector<1x8x10x10xf32>
    %7 = vector.shape_cast %6 : vector<1x8x10x10xf32> to vector<8x10x10xf32>
    %8 = arith.addf %5, %7 : vector<8x10x10xf32>
    %cst = arith.constant 5.000000e-01 : f32
    %9 = vector.broadcast %cst : f32 to vector<8x10x10xf32>
    %10 = arith.mulf %9, %8 : vector<8x10x10xf32>
    %cst_12 = arith.constant 4.471500e-02 : f32
    %11 = vector.broadcast %cst_12 : f32 to vector<8x10x10xf32>
    %12 = arith.mulf %11, %8 : vector<8x10x10xf32>
    %13 = arith.mulf %12, %8 : vector<8x10x10xf32>
    %14 = arith.mulf %13, %8 : vector<8x10x10xf32>
    %15 = arith.addf %8, %14 : vector<8x10x10xf32>
    %cst_13 = arith.constant 0.797884583 : f32
    %16 = vector.broadcast %cst_13 : f32 to vector<8x10x10xf32>
    %17 = arith.mulf %16, %15 : vector<8x10x10xf32>
    %18 = math.tanh %17 : vector<8x10x10xf32>
    %cst_14 = arith.constant 1.000000e+00 : f32
    %19 = vector.broadcast %cst_14 : f32 to vector<8x10x10xf32>
    %20 = arith.addf %19, %18 : vector<8x10x10xf32>
    %21 = arith.mulf %10, %20 : vector<8x10x10xf32>
    %22 = vector.extract_strided_slice %21 {offsets = [0, 0, 0], sizes = [8, 8, 8], strides = [1, 1, 1]} : vector<8x10x10xf32> to vector<8x8x8xf32>
    %23 = vector.shape_cast %22 : vector<8x8x8xf32> to vector<1x8x1x8x8xf32>
    %c0_15 = arith.constant 0 : index
    %c0_16 = arith.constant 0 : index
    %c0_17 = arith.constant 0 : index
    %c0_18 = arith.constant 0 : index
    %c0_19 = arith.constant 0 : index
    %24 = vector.load %arg5[%c0_15, %c0_16, %c0_17, %c0_18, %c0_19] : memref<1x8x1x8x8xf32, #tpu.memory_space<vmem>>, vector<1x8x1x8x8xf32>
    tpu.vector_store %arg5[%c0_15, %c0_16, %c0_17, %c0_18, %c0_19], %23 {strides = array<i32>} : memref<1x8x1x8x8xf32, #tpu.memory_space<vmem>>, vector<1x8x1x8x8xf32>,
    return
  }
  func.func @transform_0(%arg0: i32, %arg1: i32) -> (i32, i32, i32, i32, i32) {
    %c0_i32 = arith.constant 0 : i32
    %c0_i32_0 = arith.constant 0 : i32
    %c0_i32_1 = arith.constant 0 : i32
    %c0_i32_2 = arith.constant 0 : i32
    return %arg0, %arg1, %c0_i32, %c0_i32_0, %c0_i32_1 : i32, i32, i32, i32, i32
  }
  func.func @transform_1(%arg0: i32, %arg1: i32) -> (i32, i32, i32, i32) {
    %c0_i32 = arith.constant 0 : i32
    %c0_i32_0 = arith.constant 0 : i32
    %c0_i32_1 = arith.constant 0 : i32
    %c0_i32_2 = arith.constant 0 : i32
    %c0_i32_3 = arith.constant 0 : i32
    return %c0_i32, %c0_i32_0, %c0_i32_1, %c0_i32_2 : i32, i32, i32, i32
  }
  func.func @transform_2(%arg0: i32, %arg1: i32) -> (i32, i32, i32, i32) {
    %c0_i32 = arith.constant 0 : i32
    %c0_i32_0 = arith.constant 0 : i32
    %c0_i32_1 = arith.constant 0 : i32
    %c0_i32_2 = arith.constant 0 : i32
    %c0_i32_3 = arith.constant 0 : i32
    return %c0_i32, %c0_i32_0, %c0_i32_1, %c0_i32_2 : i32, i32, i32, i32
  }
  func.func @transform_3(%arg0: i32, %arg1: i32) -> (i32, i32, i32, i32, i32) {
    %c0_i32 = arith.constant 0 : i32
    %c0_i32_0 = arith.constant 0 : i32
    %c0_i32_1 = arith.constant 0 : i32
    %c0_i32_2 = arith.constant 0 : i32
    return %arg0, %c0_i32, %arg1, %c0_i32_0, %c0_i32_1 : i32, i32, i32, i32, i32
  }
}

</mosaic_0001>

<llo_original>
// kernel: simple_conv3d_forward.3
$region0: #{simple_conv3d_forward.3}
  #allocation0 [shape = 'u32[]', space=smem, size = 0x4, offset = 0x4, fixed_abs, tag = 'smem constant byte address 0x4 - core index']
  #allocation1 [shape = 'u32[72,128]{1,0:T(1,128)}', space=vmem, size = 0x9000, scoped, tag = 'internal scratch']
  %s0 = inlined_call_operand.vmem [shape: bf16[2,8,8,10,10], index: 0, kind: input, shape index: {}]
  %s1 = inlined_call_operand.vmem [shape: f32[1,8,10,10], index: 1, kind: input, shape index: {}]
  %s2 = inlined_call_operand.vmem [shape: f32[1,8,10,10], index: 2, kind: input, shape index: {}]
  %s3 = inlined_call_operand.hbm [shape: f32[2,8,8,8,8], index: 3, kind: output, shape index: {}]
  %s4 = sld [smem:[#allocation0]]
  $region45: #{simple_conv3d_forward.3} parent=0
    _
  %s6 = ssub.s32 1, %s4
  %s7 = scalar_select 0, %s6, %s4
  $region1: #{simple_conv3d_forward.3} parent=0
    #allocation2 [shape = 'u8[65536]{0}', space=vmem, size = 0x10000, scoped, tag = 'output window, operand 0']
    #allocation3 [shape = 's32[2]{0}', space=sflag, size = 0x8, scoped, tag = 'scoped memory for simple_conv3d_forward.3']
    %8 = vsyncpa [#allocation3], 0
    %s9 = scalar_lea.sflag [#allocation3], 1
    %10 = vsyncpa %s9, 0
    loop: start=0, step=1, limit=18
    $region2: #{simple_conv3d_forward.3} parent=1 // loop_pre_header
      _
    $region3: #{simple_conv3d_forward.3} parent=1 // loop_header
      %s12 = sphi 0, %s16
      %p13 = scmp.ge.s32.totalorder %s12, 18
      %s19 = sphi 0, %s31
      %s20 = sphi 0, %s27
      %s21 = sphi 0, %s19
      %s22 = sphi 0, %s20
      %s23 = sphi 0, %s21
      %s24 = sphi 0, %s22
      %s36 = sphi 0, %s38
      %s39 = sphi 0, %s36
      %s40 = sphi 0, %s39
      %s56 = sphi 0, %s40
      %s60 = sphi 0, %s60
      %s62 = sphi 0, %s60
      %s63 = sphi 0, %s62
      %s77 = sphi 0, %s63
      %s81 = sphi 0, %s81
      %s83 = sphi 0, %s81
      %s84 = sphi 0, %s83
      %s98 = sphi 0, %s84
      %s106 = sphi 0, %s108
      %s109 = sphi 0, %s106
      %s110 = sphi 0, %s109
      %s126 = sphi 0, %s110
    $region4: #{simple_conv3d_forward.3} parent=1 // loop_header_branch
      %15 = sbr.rel (%p13) target = $region8
    $region5: #{simple_conv3d_forward.3} parent=1 // loop_body
      %s17 = ssub.s32 %s12, 1
      %s18 = ssub.s32 %s12, 2
      %s25 = sadd.s32 1, %s20
      %p26 = scmp.ge.s32.totalorder %s25, 8
      %s27 = scalar_select %p26, 0, %s25
      %s28 = sadd.s32 1, %s19
      %s29 = scalar_select %p26, %s28, %s19
      %p30 = scmp.ge.s32.totalorder %s29, 2
      %s31 = scalar_select %p30, 0, %s29
      %s32 = ssub.s32 %s19, %s31
      %s33 = ssub.s32 %s20, %s27
      %s34 = sor.u32 %s32, %s33
      %p35 = scmp.eq.s32.totalorder %s34, 0
      %s37 = sadd.s32 %s36, 1
      %s38 = scalar_select %p35, %s36, %s37
      %p41 = pneg %p35
      %p42 = scmp.eq.s32.totalorder %s12, 15
      %p43 = por %p41, %p42
      %p44 = scmp.ne.s32.totalorder %s36, %s39
      %p45 = scmp.eq.s32.totalorder %s12, 0
      %p46 = por %p44, %p45
      %p47 = scmp.ne.s32.totalorder %s36, %s39
      %p48 = scmp.eq.s32.totalorder %s17, 15
      %p49 = por %p47, %p48
      %p50 = scmp.ne.s32.totalorder %s39, %s40
      %p51 = scmp.eq.s32.totalorder %s17, 0
      %p52 = por %p50, %p51
      %p53 = scmp.ne.s32.totalorder %s39, %s40
      %p54 = scmp.eq.s32.totalorder %s18, 15
      %p55 = por %p53, %p54
      %p57 = scmp.ne.s32.totalorder %s40, %s56
      %p58 = scmp.eq.s32.totalorder %s18, 0
      %p59 = por %p57, %p58
      %s61 = sadd.s32 %s60, 1
      %p64 = scmp.eq.s32.totalorder %s12, 15
      %p65 = scmp.ne.s32.totalorder %s60, %s62
      %p66 = scmp.eq.s32.totalorder %s12, 0
      %p67 = por %p65, %p66
      %p68 = scmp.ne.s32.totalorder %s60, %s62
      %p69 = scmp.eq.s32.totalorder %s17, 15
      %p70 = por %p68, %p69
      %p71 = scmp.ne.s32.totalorder %s62, %s63
      %p72 = scmp.eq.s32.totalorder %s17, 0
      %p73 = por %p71, %p72
      %p74 = scmp.ne.s32.totalorder %s62, %s63
      %p75 = scmp.eq.s32.totalorder %s18, 15
      %p76 = por %p74, %p75
      %p78 = scmp.ne.s32.totalorder %s63, %s77
      %p79 = scmp.eq.s32.totalorder %s18, 0
      %p80 = por %p78, %p79
      %s82 = sadd.s32 %s81, 1
      %p85 = scmp.eq.s32.totalorder %s12, 15
      %p86 = scmp.ne.s32.totalorder %s81, %s83
      %p87 = scmp.eq.s32.totalorder %s12, 0
      %p88 = por %p86, %p87
      %p89 = scmp.ne.s32.totalorder %s81, %s83
      %p90 = scmp.eq.s32.totalorder %s17, 15
      %p91 = por %p89, %p90
      %p92 = scmp.ne.s32.totalorder %s83, %s84
      %p93 = scmp.eq.s32.totalorder %s17, 0
      %p94 = por %p92, %p93
      %p95 = scmp.ne.s32.totalorder %s83, %s84
      %p96 = scmp.eq.s32.totalorder %s18, 15
      %p97 = por %p95, %p96
      %p99 = scmp.ne.s32.totalorder %s84, %s98
      %p100 = scmp.eq.s32.totalorder %s18, 0
      %p101 = por %p99, %p100
      %s102 = ssub.s32 %s19, %s31
      %s103 = ssub.s32 %s20, %s27
      %s104 = sor.u32 %s102, %s103
      %p105 = scmp.eq.s32.totalorder %s104, 0
      %s107 = sadd.s32 %s106, 1
      %s108 = scalar_select %p105, %s106, %s107
      %p111 = pneg %p105
      %p112 = scmp.eq.s32.totalorder %s12, 15
      %p113 = por %p111, %p112
      %p114 = scmp.ne.s32.totalorder %s106, %s109
      %p115 = scmp.eq.s32.totalorder %s12, 0
      %p116 = por %p114, %p115
      %p117 = scmp.ne.s32.totalorder %s106, %s109
      %p118 = scmp.eq.s32.totalorder %s17, 15
      %p119 = por %p117, %p118
      %p120 = scmp.ne.s32.totalorder %s109, %s110
      %p121 = scmp.eq.s32.totalorder %s17, 0
      %p122 = por %p120, %p121
      %p123 = scmp.ne.s32.totalorder %s109, %s110
      %p124 = scmp.eq.s32.totalorder %s18, 15
      %p125 = por %p123, %p124
      %p127 = scmp.ne.s32.totalorder %s110, %s126
      %p128 = scmp.eq.s32.totalorder %s18, 0
      %p129 = por %p127, %p128
      %p130 = scmp.le.s32.totalorder 1, %s12
      %p131 = scmp.lt.s32.totalorder %s12, 17
      %p132 = pnand %p130, %p131
      %p133 = pneg %p132
      // Predicated region
      $region9: #{simple_conv3d_forward.3} parent=5 // pred_check
        _
      $region10: #{simple_conv3d_forward.3} parent=5 // pred_check_branch
        %135 = sbr.rel (%p132) target = $region12
      $region11: #{simple_conv3d_forward.3} parent=5 // pred_region
        %s136 = ssub.s32 %s12, 1
        // Predicated region
        $region13: #{simple_conv3d_forward.3} parent=11 // pred_check
          %p137 = pneg %p73
        $region14: #{simple_conv3d_forward.3} parent=11 // pred_check_branch
          %139 = sbr.rel (%p137) target = $region16
        $region15: #{simple_conv3d_forward.3} parent=11 // pred_region
          _
        $region16: #{simple_conv3d_forward.3} parent=11 // pred_fallthru
          _
        // Predicated region
        $region17: #{simple_conv3d_forward.3} parent=11 // pred_check
          %p140 = pneg %p94
        $region18: #{simple_conv3d_forward.3} parent=11 // pred_check_branch
          %142 = sbr.rel (%p140) target = $region20
        $region19: #{simple_conv3d_forward.3} parent=11 // pred_region
          _
        $region20: #{simple_conv3d_forward.3} parent=11 // pred_fallthru
          _
      $region12: #{simple_conv3d_forward.3} parent=5 // pred_fallthru
        _
      %p143 = scmp.lt.s32.totalorder %s12, 16
      // Predicated region
      $region21: #{simple_conv3d_forward.3} parent=5 // pred_check
        %p144 = pneg %p143
      $region22: #{simple_conv3d_forward.3} parent=5 // pred_check_branch
        %146 = sbr.rel (%p144) target = $region24
      $region23: #{simple_conv3d_forward.3} parent=5 // pred_region
        // Predicated region
        $region25: #{simple_conv3d_forward.3} parent=23 // pred_check
          %p147 = pneg %p46
        $region26: #{simple_conv3d_forward.3} parent=23 // pred_check_branch
          %149 = sbr.rel (%p147) target = $region28
        $region27: #{simple_conv3d_forward.3} parent=23 // pred_region
          %p150 = scmp.lt.s32.totalorder %s19, 1
          %s151 = scalar_select %p150, %s19, 1
          %p152 = scmp.lt.s32.totalorder %s20, 7
          %s153 = scalar_select %p152, %s20, 7
          %s154 = smul.addr %s153, 16
          %s155 = smul.addr %s151, 128
          %s156 = sadd.s32 %s154, %s155
          %s157 = smul.addr %s156, 4
          %s158 = scalar_lea.vmem %s0, %s157
        $region28: #{simple_conv3d_forward.3} parent=23 // pred_fallthru
          _
      $region24: #{simple_conv3d_forward.3} parent=5 // pred_fallthru
        _
      %p159 = scmp.le.s32.totalorder 1, %s12
      %p160 = scmp.lt.s32.totalorder %s12, 17
      %p161 = pnand %p159, %p160
      %p162 = pneg %p161
      // Predicated region
      $region29: #{simple_conv3d_forward.3} parent=5 // pred_check
        _
      $region30: #{simple_conv3d_forward.3} parent=5 // pred_check_branch
        %164 = sbr.rel (%p161) target = $region32
      $region31: #{simple_conv3d_forward.3} parent=5 // pred_region
        %s165 = ssub.s32 %s12, 1
        %p166 = scmp.lt.s32.totalorder %s21, 1
        %s167 = scalar_select %p166, %s21, 1
        %p168 = scmp.lt.s32.totalorder %s22, 7
        %s169 = scalar_select %p168, %s22, 7
        %s170 = smul.addr %s169, 16
        %s171 = smul.addr %s167, 128
        %s172 = sadd.s32 %s170, %s171
        %s173 = smul.addr %s172, 4
        %s174 = scalar_lea.vmem %s0, %s173
        %p175 = pneg %p52
        %p176 = pneg %p49
        %p177 = pneg %p73
        %p178 = pneg %p70
        %p179 = pneg %p94
        %p180 = pneg %p91
        %p181 = pneg %p122
        %p182 = pneg %p119
        %s183 = sand.u32 %s109, 1
        %s184 = scalar_lea.sflag [#allocation3], %s183
        %s185 = sand.u32 %s109, 1
        %s186 = smul.addr %s185, 64
        %s187 = scalar_lea.vmem [#allocation2], %s186
        %p188 = scmp.lt.s32.totalorder %s21, 1
        %s189 = scalar_select %p188, %s21, 1
        %p190 = scmp.lt.s32.totalorder %s22, 7
        %s191 = scalar_select %p190, %s22, 7
        %s192 = smul.addr %s191, 16
        %s193 = smul.addr %s189, 128
        %s194 = sadd.s32 %s192, %s193
        %s195 = smul.addr %s194, 4
        %s196 = scalar_lea.vmem %s0, %s195
        %v197 = vld [vmem:[%s196] sm:$0xf]
        %v198 = vld [vmem:[%s196 + $0x8] sm:$0xf]
        %v199 = vld [vmem:[%s196 + $0x10] sm:$0xf]
        %v200 = vld [vmem:[%s196 + $0x18] sm:$0xf]
        %v201 = vld [vmem:[%s196 + $0x20] sm:$0xf]
        %v202 = vld [vmem:[%s196 + $0x28] sm:$0xf]
        %v203 = vld [vmem:[%s196 + $0x30] sm:$0xf]
        %v204 = vld [vmem:[%s196 + $0x38] sm:$0xf]
        %v205 = vunpack.c.l.bf16 %v197
        %v206 = vunpack.c.l.bf16 %v198
        %v207 = vunpack.c.l.bf16 %v199
        %v208 = vunpack.c.l.bf16 %v200
        %v209 = vunpack.c.l.bf16 %v201
        %v210 = vunpack.c.l.bf16 %v202
        %v211 = vunpack.c.l.bf16 %v203
        %v212 = vunpack.c.l.bf16 %v204
        %v213 = vld [vmem:[%s1] sm:$0xff]
        %v214 = vld [vmem:[%s1 + $0x10] sm:$0xff]
        %v215 = vld [vmem:[%s1 + $0x20] sm:$0xff]
        %v216 = vld [vmem:[%s1 + $0x30] sm:$0xff]
        %v217 = vld [vmem:[%s1 + $0x40] sm:$0xff]
        %v218 = vld [vmem:[%s1 + $0x50] sm:$0xff]
        %v219 = vld [vmem:[%s1 + $0x60] sm:$0xff]
        %v220 = vld [vmem:[%s1 + $0x70] sm:$0xff]
        %v221 = vmul.f32 %v205, %v213
        %v222 = vmul.f32 %v206, %v214
        %v223 = vmul.f32 %v207, %v215
        %v224 = vmul.f32 %v208, %v216
        %v225 = vmul.f32 %v209, %v217
        %v226 = vmul.f32 %v210, %v218
        %v227 = vmul.f32 %v211, %v219
        %v228 = vmul.f32 %v212, %v220
        %v229 = vld [vmem:[%s2] sm:$0xff]
        %v230 = vld [vmem:[%s2 + $0x10] sm:$0xff]
        %v231 = vld [vmem:[%s2 + $0x20] sm:$0xff]
        %v232 = vld [vmem:[%s2 + $0x30] sm:$0xff]
        %v233 = vld [vmem:[%s2 + $0x40] sm:$0xff]
        %v234 = vld [vmem:[%s2 + $0x50] sm:$0xff]
        %v235 = vld [vmem:[%s2 + $0x60] sm:$0xff]
        %v236 = vld [vmem:[%s2 + $0x70] sm:$0xff]
        %v237 = vadd.f32 %v221, %v229
        %v238 = vadd.f32 %v222, %v230
        %v239 = vadd.f32 %v223, %v231
        %v240 = vadd.f32 %v224, %v232
        %v241 = vadd.f32 %v225, %v233
        %v242 = vadd.f32 %v226, %v234
        %v243 = vadd.f32 %v227, %v235
        %v244 = vadd.f32 %v228, %v236
        %v245 = vmul.f32 %v237, 0.5
        %v246 = vmul.f32 %v238, 0.5
        %v247 = vmul.f32 %v239, 0.5
        %v248 = vmul.f32 %v240, 0.5
        %v249 = vmul.f32 %v241, 0.5
        %v250 = vmul.f32 %v242, 0.5
        %v251 = vmul.f32 %v243, 0.5
        %v252 = vmul.f32 %v244, 0.5
        %v253 = vmul.f32 %v237, 0.044715
        %v254 = vmul.f32 %v238, 0.044715
        %v255 = vmul.f32 %v239, 0.044715
        %v256 = vmul.f32 %v240, 0.044715
        %v257 = vmul.f32 %v241, 0.044715
        %v258 = vmul.f32 %v242, 0.044715
        %v259 = vmul.f32 %v243, 0.044715
        %v260 = vmul.f32 %v244, 0.044715
        %v261 = vmul.f32 %v253, %v237
        %v262 = vmul.f32 %v254, %v238
        %v263 = vmul.f32 %v255, %v239
        %v264 = vmul.f32 %v256, %v240
        %v265 = vmul.f32 %v257, %v241
        %v266 = vmul.f32 %v258, %v242
        %v267 = vmul.f32 %v259, %v243
        %v268 = vmul.f32 %v260, %v244
        %v269 = vmul.f32 %v261, %v237
        %v270 = vmul.f32 %v262, %v238
        %v271 = vmul.f32 %v263, %v239
        %v272 = vmul.f32 %v264, %v240
        %v273 = vmul.f32 %v265, %v241
        %v274 = vmul.f32 %v266, %v242
        %v275 = vmul.f32 %v267, %v243
        %v276 = vmul.f32 %v268, %v244
        %v277 = vadd.f32 %v237, %v269
        %v278 = vadd.f32 %v238, %v270
        %v279 = vadd.f32 %v239, %v271
        %v280 = vadd.f32 %v240, %v272
        %v281 = vadd.f32 %v241, %v273
        %v282 = vadd.f32 %v242, %v274
        %v283 = vadd.f32 %v243, %v275
        %v284 = vadd.f32 %v244, %v276
        %v285 = vmul.f32 %v277, 0.7978846
        %v286 = vmul.f32 %v278, 0.7978846
        %v287 = vmul.f32 %v279, 0.7978846
        %v288 = vmul.f32 %v280, 0.7978846
        %v289 = vmul.f32 %v281, 0.7978846
        %v290 = vmul.f32 %v282, 0.7978846
        %v291 = vmul.f32 %v283, 0.7978846
        %v292 = vmul.f32 %v284, 0.7978846
        %v293 = vtanh.pop %v285
        %v294 = vtanh.pop %v286
        %v295 = vtanh.pop %v287
        %v296 = vtanh.pop %v288
        %v297 = vtanh.pop %v289
        %v298 = vtanh.pop %v290
        %v299 = vtanh.pop %v291
        %v300 = vtanh.pop %v292
        %v301 = vadd.f32 %v293, 1.0
        %v302 = vadd.f32 %v294, 1.0
        %v303 = vadd.f32 %v295, 1.0
        %v304 = vadd.f32 %v296, 1.0
        %v305 = vadd.f32 %v297, 1.0
        %v306 = vadd.f32 %v298, 1.0
        %v307 = vadd.f32 %v299, 1.0
        %v308 = vadd.f32 %v300, 1.0
        %v309 = vmul.f32 %v245, %v301
        %v310 = vmul.f32 %v246, %v302
        %v311 = vmul.f32 %v247, %v303
        %v312 = vmul.f32 %v248, %v304
        %v313 = vmul.f32 %v249, %v305
        %v314 = vmul.f32 %v250, %v306
        %v315 = vmul.f32 %v251, %v307
        %v316 = vmul.f32 %v252, %v308
        %vm317 = vcmask 64512
        %318 = vst.msk [vmem:[%s187] sm:$0xff] %vm317, %v309
        %319 = vst.msk [vmem:[%s187 + $0x8] sm:$0xff] %vm317, %v310
        %320 = vst.msk [vmem:[%s187 + $0x10] sm:$0xff] %vm317, %v311
        %321 = vst.msk [vmem:[%s187 + $0x18] sm:$0xff] %vm317, %v312
        %322 = vst.msk [vmem:[%s187 + $0x20] sm:$0xff] %vm317, %v313
        %323 = vst.msk [vmem:[%s187 + $0x28] sm:$0xff] %vm317, %v314
        %324 = vst.msk [vmem:[%s187 + $0x30] sm:$0xff] %vm317, %v315
        %325 = vst.msk [vmem:[%s187 + $0x38] sm:$0xff] %vm317, %v316
        %s326 = sand.u32 %s109, 1
        %s327 = scalar_lea.sflag [#allocation3], %s326
        %s328 = sand.u32 %s109, 1
        %s329 = smul.addr %s328, 64
        %s330 = scalar_lea.vmem [#allocation2], %s329
        // Predicated region
        $region33: #{simple_conv3d_forward.3} parent=31 // pred_check
          %p331 = pneg %p119
        $region34: #{simple_conv3d_forward.3} parent=31 // pred_check_branch
          %333 = sbr.rel (%p331) target = $region36
        $region35: #{simple_conv3d_forward.3} parent=31 // pred_region
          %335 = vsyncadd %s327, 0
          %s336 = smul.addr %s21, 64
          %s337 = sadd.s32 %s22, %s336
          %s338 = smul.addr %s337, 8
          %s339 = scalar_lea.hbm %s3, %s338
          %s340 = sshll.u32 %s330, 4
          %s341 = int_to_ptr.vmem [resolvable:$true] %s340
          %s342 = sshll.u32 %s339, 4
          %s343 = int_to_ptr.hbm [resolvable:$true] %s342
          %348 = dma.vmem_to_hbm [thread:$0]  %s341, 1024, %s343, %s327, 128, 1024, 8
        $region36: #{simple_conv3d_forward.3} parent=31 // pred_fallthru
          _
      $region32: #{simple_conv3d_forward.3} parent=5 // pred_fallthru
        _
      %p349 = scmp.le.s32.totalorder 2, %s12
      // Predicated region
      $region37: #{simple_conv3d_forward.3} parent=5 // pred_check
        %p350 = pneg %p349
      $region38: #{simple_conv3d_forward.3} parent=5 // pred_check_branch
        %352 = sbr.rel (%p350) target = $region40
      $region39: #{simple_conv3d_forward.3} parent=5 // pred_region
        %s353 = ssub.s32 %s12, 2
        // Predicated region
        $region41: #{simple_conv3d_forward.3} parent=39 // pred_check
          %p354 = pneg %p125
        $region42: #{simple_conv3d_forward.3} parent=39 // pred_check_branch
          %356 = sbr.rel (%p354) target = $region44
        $region43: #{simple_conv3d_forward.3} parent=39 // pred_region
          %s357 = sand.u32 %s110, 1
          %s358 = scalar_lea.sflag [#allocation3], %s357
          %s359 = sand.u32 %s110, 1
          %s360 = smul.addr %s359, 64
          %s361 = scalar_lea.vmem [#allocation2], %s360
          %363 = dma.done %s358, 1024
        $region44: #{simple_conv3d_forward.3} parent=39 // pred_fallthru
          _
      $region40: #{simple_conv3d_forward.3} parent=5 // pred_fallthru
        _
    $region6: #{simple_conv3d_forward.3} parent=1 // loop_footer
      %s16 = sadd.s32 1, %s12
    $region7: #{simple_conv3d_forward.3} parent=1 // loop_footer_branch
      %11 = sbr.rel target = $region3
    $region8: #{simple_conv3d_forward.3} parent=1 // loop_exit
      _
    %364 = vsyncpa [#allocation3], 1
    %s365 = scalar_lea.sflag [#allocation3], 1
    %366 = vsyncpa %s365, 1

// kernel: simple_conv3d_forward.2
$region0: #{simple_conv3d_forward.2}
  #allocation0 [shape = 'u32[]', space=smem, size = 0x4, offset = 0x4, fixed_abs, tag = 'smem constant byte address 0x4 - core index']
  #allocation1 [shape = 'u32[72,128]{1,0:T(1,128)}', space=vmem, size = 0x9000, scoped, tag = 'internal scratch']
  %s0 = inlined_call_operand.vmem [shape: bf16[2,10,4,122], index: 0, kind: input, shape index: {}, may-alias: {0,1,2}]
  %s1 = inlined_call_operand.vmem [shape: bf16[2,10,4,122], index: 1, kind: input, shape index: {}, may-alias: {0,1,2}]
  %s2 = inlined_call_operand.vmem [shape: bf16[2,10,4,122], index: 2, kind: input, shape index: {}, may-alias: {0,1,2}]
  %s3 = inlined_call_operand.vmem [shape: bf16[3,9,8,4], index: 3, kind: input, shape index: {}]
  %s4 = inlined_call_operand.vmem [shape: f32[1,100], index: 4, kind: input, shape index: {}]
  %s5 = inlined_call_operand.vmem [shape: bf16[2,8,8,100], index: 5, kind: output, shape index: {0}]
  %s6 = inlined_call_operand.vmem [shape: f32[2,8,8,1], index: 6, kind: output, shape index: {1}]
  %s7 = inlined_call_operand.vmem [shape: f32[2,8,8,1], index: 7, kind: output, shape index: {2}]
  %8 = xla_tuple %s5, %s6, %s7
  %s9 = sld [smem:[#allocation0]]
  $region69: #{simple_conv3d_forward.2} parent=0
    _
  %s11 = ssub.s32 1, %s9
  %s12 = scalar_select 0, %s11, %s9
  loop: start=0, step=1, limit=18
  $region2: #{simple_conv3d_forward.2} parent=0 // loop_pre_header
    _
  $region3: #{simple_conv3d_forward.2} parent=0 // loop_header
    %s14 = sphi 0, %s18
    %p15 = scmp.ge.s32.totalorder %s14, 18
    %s21 = sphi 0, %s33
    %s22 = sphi 0, %s29
    %s23 = sphi 0, %s21
    %s24 = sphi 0, %s22
    %s25 = sphi 0, %s23
    %s26 = sphi 0, %s24
    %s38 = sphi 0, %s40
    %s41 = sphi 0, %s38
    %s42 = sphi 0, %s41
    %s58 = sphi 0, %s42
    %s68 = sphi 0, %s70
    %s71 = sphi 0, %s68
    %s72 = sphi 0, %s71
    %s88 = sphi 0, %s72
    %s98 = sphi 0, %s100
    %s101 = sphi 0, %s98
    %s102 = sphi 0, %s101
    %s118 = sphi 0, %s102
    %s122 = sphi 0, %s122
    %s124 = sphi 0, %s122
    %s125 = sphi 0, %s124
    %s139 = sphi 0, %s125
    %s143 = sphi 0, %s143
    %s145 = sphi 0, %s143
    %s146 = sphi 0, %s145
    %s160 = sphi 0, %s146
    %s168 = sphi 0, %s170
    %s171 = sphi 0, %s168
    %s172 = sphi 0, %s171
    %s188 = sphi 0, %s172
    %s196 = sphi 0, %s198
    %s199 = sphi 0, %s196
    %s200 = sphi 0, %s199
    %s216 = sphi 0, %s200
    %s224 = sphi 0, %s226
    %s227 = sphi 0, %s224
    %s228 = sphi 0, %s227
    %s244 = sphi 0, %s228
  $region4: #{simple_conv3d_forward.2} parent=0 // loop_header_branch
    %17 = sbr.rel (%p15) target = $region8
  $region5: #{simple_conv3d_forward.2} parent=0 // loop_body
    %s19 = ssub.s32 %s14, 1
    %s20 = ssub.s32 %s14, 2
    %s27 = sadd.s32 1, %s22
    %p28 = scmp.ge.s32.totalorder %s27, 8
    %s29 = scalar_select %p28, 0, %s27
    %s30 = sadd.s32 1, %s21
    %s31 = scalar_select %p28, %s30, %s21
    %p32 = scmp.ge.s32.totalorder %s31, 2
    %s33 = scalar_select %p32, 0, %s31
    %s34 = ssub.s32 %s21, %s33
    %s35 = ssub.s32 %s22, %s29
    %s36 = sor.u32 %s34, %s35
    %p37 = scmp.eq.s32.totalorder %s36, 0
    %s39 = sadd.s32 %s38, 1
    %s40 = scalar_select %p37, %s38, %s39
    %p43 = pneg %p37
    %p44 = scmp.eq.s32.totalorder %s14, 15
    %p45 = por %p43, %p44
    %p46 = scmp.ne.s32.totalorder %s38, %s41
    %p47 = scmp.eq.s32.totalorder %s14, 0
    %p48 = por %p46, %p47
    %p49 = scmp.ne.s32.totalorder %s38, %s41
    %p50 = scmp.eq.s32.totalorder %s19, 15
    %p51 = por %p49, %p50
    %p52 = scmp.ne.s32.totalorder %s41, %s42
    %p53 = scmp.eq.s32.totalorder %s19, 0
    %p54 = por %p52, %p53
    %p55 = scmp.ne.s32.totalorder %s41, %s42
    %p56 = scmp.eq.s32.totalorder %s20, 15
    %p57 = por %p55, %p56
    %p59 = scmp.ne.s32.totalorder %s42, %s58
    %p60 = scmp.eq.s32.totalorder %s20, 0
    %p61 = por %p59, %p60
    %s62 = sadd.s32 %s22, 1
    %s63 = sadd.s32 %s29, 1
    %s64 = ssub.s32 %s21, %s33
    %s65 = ssub.s32 %s62, %s63
    %s66 = sor.u32 %s64, %s65
    %p67 = scmp.eq.s32.totalorder %s66, 0
    %s69 = sadd.s32 %s68, 1
    %s70 = scalar_select %p67, %s68, %s69
    %p73 = pneg %p67
    %p74 = scmp.eq.s32.totalorder %s14, 15
    %p75 = por %p73, %p74
    %p76 = scmp.ne.s32.totalorder %s68, %s71
    %p77 = scmp.eq.s32.totalorder %s14, 0
    %p78 = por %p76, %p77
    %p79 = scmp.ne.s32.totalorder %s68, %s71
    %p80 = scmp.eq.s32.totalorder %s19, 15
    %p81 = por %p79, %p80
    %p82 = scmp.ne.s32.totalorder %s71, %s72
    %p83 = scmp.eq.s32.totalorder %s19, 0
    %p84 = por %p82, %p83
    %p85 = scmp.ne.s32.totalorder %s71, %s72
    %p86 = scmp.eq.s32.totalorder %s20, 15
    %p87 = por %p85, %p86
    %p89 = scmp.ne.s32.totalorder %s72, %s88
    %p90 = scmp.eq.s32.totalorder %s20, 0
    %p91 = por %p89, %p90
    %s92 = sadd.s32 %s22, 2
    %s93 = sadd.s32 %s29, 2
    %s94 = ssub.s32 %s21, %s33
    %s95 = ssub.s32 %s92, %s93
    %s96 = sor.u32 %s94, %s95
    %p97 = scmp.eq.s32.totalorder %s96, 0
    %s99 = sadd.s32 %s98, 1
    %s100 = scalar_select %p97, %s98, %s99
    %p103 = pneg %p97
    %p104 = scmp.eq.s32.totalorder %s14, 15
    %p105 = por %p103, %p104
    %p106 = scmp.ne.s32.totalorder %s98, %s101
    %p107 = scmp.eq.s32.totalorder %s14, 0
    %p108 = por %p106, %p107
    %p109 = scmp.ne.s32.totalorder %s98, %s101
    %p110 = scmp.eq.s32.totalorder %s19, 15
    %p111 = por %p109, %p110
    %p112 = scmp.ne.s32.totalorder %s101, %s102
    %p113 = scmp.eq.s32.totalorder %s19, 0
    %p114 = por %p112, %p113
    %p115 = scmp.ne.s32.totalorder %s101, %s102
    %p116 = scmp.eq.s32.totalorder %s20, 15
    %p117 = por %p115, %p116
    %p119 = scmp.ne.s32.totalorder %s102, %s118
    %p120 = scmp.eq.s32.totalorder %s20, 0
    %p121 = por %p119, %p120
    %s123 = sadd.s32 %s122, 1
    %p126 = scmp.eq.s32.totalorder %s14, 15
    %p127 = scmp.ne.s32.totalorder %s122, %s124
    %p128 = scmp.eq.s32.totalorder %s14, 0
    %p129 = por %p127, %p128
    %p130 = scmp.ne.s32.totalorder %s122, %s124
    %p131 = scmp.eq.s32.totalorder %s19, 15
    %p132 = por %p130, %p131
    %p133 = scmp.ne.s32.totalorder %s124, %s125
    %p134 = scmp.eq.s32.totalorder %s19, 0
    %p135 = por %p133, %p134
    %p136 = scmp.ne.s32.totalorder %s124, %s125
    %p137 = scmp.eq.s32.totalorder %s20, 15
    %p138 = por %p136, %p137
    %p140 = scmp.ne.s32.totalorder %s125, %s139
    %p141 = scmp.eq.s32.totalorder %s20, 0
    %p142 = por %p140, %p141
    %s144 = sadd.s32 %s143, 1
    %p147 = scmp.eq.s32.totalorder %s14, 15
    %p148 = scmp.ne.s32.totalorder %s143, %s145
    %p149 = scmp.eq.s32.totalorder %s14, 0
    %p150 = por %p148, %p149
    %p151 = scmp.ne.s32.totalorder %s143, %s145
    %p152 = scmp.eq.s32.totalorder %s19, 15
    %p153 = por %p151, %p152
    %p154 = scmp.ne.s32.totalorder %s145, %s146
    %p155 = scmp.eq.s32.totalorder %s19, 0
    %p156 = por %p154, %p155
    %p157 = scmp.ne.s32.totalorder %s145, %s146
    %p158 = scmp.eq.s32.totalorder %s20, 15
    %p159 = por %p157, %p158
    %p161 = scmp.ne.s32.totalorder %s146, %s160
    %p162 = scmp.eq.s32.totalorder %s20, 0
    %p163 = por %p161, %p162
    %s164 = ssub.s32 %s21, %s33
    %s165 = ssub.s32 %s22, %s29
    %s166 = sor.u32 %s164, %s165
    %p167 = scmp.eq.s32.totalorder %s166, 0
    %s169 = sadd.s32 %s168, 1
    %s170 = scalar_select %p167, %s168, %s169
    %p173 = pneg %p167
    %p174 = scmp.eq.s32.totalorder %s14, 15
    %p175 = por %p173, %p174
    %p176 = scmp.ne.s32.totalorder %s168, %s171
    %p177 = scmp.eq.s32.totalorder %s14, 0
    %p178 = por %p176, %p177
    %p179 = scmp.ne.s32.totalorder %s168, %s171
    %p180 = scmp.eq.s32.totalorder %s19, 15
    %p181 = por %p179, %p180
    %p182 = scmp.ne.s32.totalorder %s171, %s172
    %p183 = scmp.eq.s32.totalorder %s19, 0
    %p184 = por %p182, %p183
    %p185 = scmp.ne.s32.totalorder %s171, %s172
    %p186 = scmp.eq.s32.totalorder %s20, 15
    %p187 = por %p185, %p186
    %p189 = scmp.ne.s32.totalorder %s172, %s188
    %p190 = scmp.eq.s32.totalorder %s20, 0
    %p191 = por %p189, %p190
    %s192 = ssub.s32 %s21, %s33
    %s193 = ssub.s32 %s22, %s29
    %s194 = sor.u32 %s192, %s193
    %p195 = scmp.eq.s32.totalorder %s194, 0
    %s197 = sadd.s32 %s196, 1
    %s198 = scalar_select %p195, %s196, %s197
    %p201 = pneg %p195
    %p202 = scmp.eq.s32.totalorder %s14, 15
    %p203 = por %p201, %p202
    %p204 = scmp.ne.s32.totalorder %s196, %s199
    %p205 = scmp.eq.s32.totalorder %s14, 0
    %p206 = por %p204, %p205
    %p207 = scmp.ne.s32.totalorder %s196, %s199
    %p208 = scmp.eq.s32.totalorder %s19, 15
    %p209 = por %p207, %p208
    %p210 = scmp.ne.s32.totalorder %s199, %s200
    %p211 = scmp.eq.s32.totalorder %s19, 0
    %p212 = por %p210, %p211
    %p213 = scmp.ne.s32.totalorder %s199, %s200
    %p214 = scmp.eq.s32.totalorder %s20, 15
    %p215 = por %p213, %p214
    %p217 = scmp.ne.s32.totalorder %s200, %s216
    %p218 = scmp.eq.s32.totalorder %s20, 0
    %p219 = por %p217, %p218
    %s220 = ssub.s32 %s21, %s33
    %s221 = ssub.s32 %s22, %s29
    %s222 = sor.u32 %s220, %s221
    %p223 = scmp.eq.s32.totalorder %s222, 0
    %s225 = sadd.s32 %s224, 1
    %s226 = scalar_select %p223, %s224, %s225
    %p229 = pneg %p223
    %p230 = scmp.eq.s32.totalorder %s14, 15
    %p231 = por %p229, %p230
    %p232 = scmp.ne.s32.totalorder %s224, %s227
    %p233 = scmp.eq.s32.totalorder %s14, 0
    %p234 = por %p232, %p233
    %p235 = scmp.ne.s32.totalorder %s224, %s227
    %p236 = scmp.eq.s32.totalorder %s19, 15
    %p237 = por %p235, %p236
    %p238 = scmp.ne.s32.totalorder %s227, %s228
    %p239 = scmp.eq.s32.totalorder %s19, 0
    %p240 = por %p238, %p239
    %p241 = scmp.ne.s32.totalorder %s227, %s228
    %p242 = scmp.eq.s32.totalorder %s20, 15
    %p243 = por %p241, %p242
    %p245 = scmp.ne.s32.totalorder %s228, %s244
    %p246 = scmp.eq.s32.totalorder %s20, 0
    %p247 = por %p245, %p246
    %p248 = scmp.le.s32.totalorder 1, %s14
    %p249 = scmp.lt.s32.totalorder %s14, 17
    %p250 = pnand %p248, %p249
    %p251 = pneg %p250
    // Predicated region
    $region9: #{simple_conv3d_forward.2} parent=5 // pred_check
      _
    $region10: #{simple_conv3d_forward.2} parent=5 // pred_check_branch
      %253 = sbr.rel (%p250) target = $region12
    $region11: #{simple_conv3d_forward.2} parent=5 // pred_region
      %s254 = ssub.s32 %s14, 1
      // Predicated region
      $region13: #{simple_conv3d_forward.2} parent=11 // pred_check
        %p255 = pneg %p135
      $region14: #{simple_conv3d_forward.2} parent=11 // pred_check_branch
        %257 = sbr.rel (%p255) target = $region16
      $region15: #{simple_conv3d_forward.2} parent=11 // pred_region
        _
      $region16: #{simple_conv3d_forward.2} parent=11 // pred_fallthru
        _
      // Predicated region
      $region17: #{simple_conv3d_forward.2} parent=11 // pred_check
        %p258 = pneg %p156
      $region18: #{simple_conv3d_forward.2} parent=11 // pred_check_branch
        %260 = sbr.rel (%p258) target = $region20
      $region19: #{simple_conv3d_forward.2} parent=11 // pred_region
        _
      $region20: #{simple_conv3d_forward.2} parent=11 // pred_fallthru
        _
    $region12: #{simple_conv3d_forward.2} parent=5 // pred_fallthru
      _
    %p261 = scmp.lt.s32.totalorder %s14, 16
    // Predicated region
    $region21: #{simple_conv3d_forward.2} parent=5 // pred_check
      %p262 = pneg %p261
    $region22: #{simple_conv3d_forward.2} parent=5 // pred_check_branch
      %264 = sbr.rel (%p262) target = $region24
    $region23: #{simple_conv3d_forward.2} parent=5 // pred_region
      // Predicated region
      $region25: #{simple_conv3d_forward.2} parent=23 // pred_check
        %p265 = pneg %p48
      $region26: #{simple_conv3d_forward.2} parent=23 // pred_check_branch
        %267 = sbr.rel (%p265) target = $region28
      $region27: #{simple_conv3d_forward.2} parent=23 // pred_region
        %p268 = scmp.lt.s32.totalorder %s21, 1
        %s269 = scalar_select %p268, %s21, 1
        %p270 = scmp.lt.s32.totalorder %s22, 9
        %s271 = scalar_select %p270, %s22, 9
        %s272 = smul.addr %s269, 10
        %s273 = sadd.s32 %s271, %s272
        %s274 = smul.addr %s273, 2
        %s275 = scalar_lea.vmem %s0, %s274
      $region28: #{simple_conv3d_forward.2} parent=23 // pred_fallthru
        _
      // Predicated region
      $region29: #{simple_conv3d_forward.2} parent=23 // pred_check
        %p276 = pneg %p78
      $region30: #{simple_conv3d_forward.2} parent=23 // pred_check_branch
        %278 = sbr.rel (%p276) target = $region32
      $region31: #{simple_conv3d_forward.2} parent=23 // pred_region
        %s279 = sadd.s32 %s22, 1
        %p280 = scmp.lt.s32.totalorder %s21, 1
        %s281 = scalar_select %p280, %s21, 1
        %p282 = scmp.lt.s32.totalorder %s279, 9
        %s283 = scalar_select %p282, %s279, 9
        %s284 = smul.addr %s281, 10
        %s285 = sadd.s32 %s283, %s284
        %s286 = smul.addr %s285, 2
        %s287 = scalar_lea.vmem %s1, %s286
        %s288 = sadd.s32 %s22, 1
      $region32: #{simple_conv3d_forward.2} parent=23 // pred_fallthru
        _
      // Predicated region
      $region33: #{simple_conv3d_forward.2} parent=23 // pred_check
        %p289 = pneg %p108
      $region34: #{simple_conv3d_forward.2} parent=23 // pred_check_branch
        %291 = sbr.rel (%p289) target = $region36
      $region35: #{simple_conv3d_forward.2} parent=23 // pred_region
        %s292 = sadd.s32 %s22, 2
        %p293 = scmp.lt.s32.totalorder %s21, 1
        %s294 = scalar_select %p293, %s21, 1
        %p295 = scmp.lt.s32.totalorder %s292, 9
        %s296 = scalar_select %p295, %s292, 9
        %s297 = smul.addr %s294, 10
        %s298 = sadd.s32 %s296, %s297
        %s299 = smul.addr %s298, 2
        %s300 = scalar_lea.vmem %s2, %s299
        %s301 = sadd.s32 %s22, 2
      $region36: #{simple_conv3d_forward.2} parent=23 // pred_fallthru
        _
    $region24: #{simple_conv3d_forward.2} parent=5 // pred_fallthru
      _
    %p302 = scmp.le.s32.totalorder 1, %s14
    %p303 = scmp.lt.s32.totalorder %s14, 17
    %p304 = pnand %p302, %p303
    %p305 = pneg %p304
    // Predicated region
    $region37: #{simple_conv3d_forward.2} parent=5 // pred_check
      _
    $region38: #{simple_conv3d_forward.2} parent=5 // pred_check_branch
      %307 = sbr.rel (%p304) target = $region40
    $region39: #{simple_conv3d_forward.2} parent=5 // pred_region
      %s308 = ssub.s32 %s14, 1
      %p309 = scmp.lt.s32.totalorder %s23, 1
      %s310 = scalar_select %p309, %s23, 1
      %p311 = scmp.lt.s32.totalorder %s24, 9
      %s312 = scalar_select %p311, %s24, 9
      %s313 = smul.addr %s310, 10
      %s314 = sadd.s32 %s312, %s313
      %s315 = smul.addr %s314, 2
      %s316 = scalar_lea.vmem %s0, %s315
      %p317 = pneg %p54
      %p318 = pneg %p51
      %s319 = sadd.s32 %s24, 1
      %p320 = scmp.lt.s32.totalorder %s23, 1
      %s321 = scalar_select %p320, %s23, 1
      %p322 = scmp.lt.s32.totalorder %s319, 9
      %s323 = scalar_select %p322, %s319, 9
      %s324 = smul.addr %s321, 10
      %s325 = sadd.s32 %s323, %s324
      %s326 = smul.addr %s325, 2
      %s327 = scalar_lea.vmem %s1, %s326
      %p328 = pneg %p84
      %p329 = pneg %p81
      %s330 = sadd.s32 %s24, 2
      %p331 = scmp.lt.s32.totalorder %s23, 1
      %s332 = scalar_select %p331, %s23, 1
      %p333 = scmp.lt.s32.totalorder %s330, 9
      %s334 = scalar_select %p333, %s330, 9
      %s335 = smul.addr %s332, 10
      %s336 = sadd.s32 %s334, %s335
      %s337 = smul.addr %s336, 2
      %s338 = scalar_lea.vmem %s2, %s337
      %p339 = pneg %p114
      %p340 = pneg %p111
      %p341 = pneg %p135
      %p342 = pneg %p132
      %p343 = pneg %p156
      %p344 = pneg %p153
      %p345 = pneg %p184
      %p346 = pneg %p181
      %p347 = scmp.lt.s32.totalorder %s23, 1
      %s348 = scalar_select %p347, %s23, 1
      %p349 = scmp.lt.s32.totalorder %s24, 7
      %s350 = scalar_select %p349, %s24, 7
      %s351 = smul.addr %s348, 8
      %s352 = sadd.s32 %s350, %s351
      %s353 = smul.addr %s352, 4
      %s354 = scalar_lea.vmem %s5, %s353
      %p355 = pneg %p212
      %p356 = pneg %p209
      %p357 = scmp.lt.s32.totalorder %s23, 1
      %s358 = scalar_select %p357, %s23, 1
      %p359 = scmp.lt.s32.totalorder %s24, 7
      %s360 = scalar_select %p359, %s24, 7
      %s361 = smul.addr %s358, 8
      %s362 = sadd.s32 %s360, %s361
      %s363 = smul.addr %s362, 8
      %s364 = scalar_lea.vmem %s6, %s363
      %p365 = pneg %p240
      %p366 = pneg %p237
      %p367 = scmp.lt.s32.totalorder %s23, 1
      %s368 = scalar_select %p367, %s23, 1
      %p369 = scmp.lt.s32.totalorder %s24, 7
      %s370 = scalar_select %p369, %s24, 7
      %s371 = smul.addr %s368, 8
      %s372 = sadd.s32 %s370, %s371
      %s373 = smul.addr %s372, 8
      %s374 = scalar_lea.vmem %s7, %s373
      %p375 = scmp.lt.s32.totalorder %s23, 1
      %s376 = scalar_select %p375, %s23, 1
      %p377 = scmp.lt.s32.totalorder %s24, 9
      %s378 = scalar_select %p377, %s24, 9
      %s379 = smul.addr %s376, 10
      %s380 = sadd.s32 %s378, %s379
      %s381 = smul.addr %s380, 2
      %s382 = scalar_lea.vmem %s0, %s381
      %s383 = sadd.s32 %s24, 1
      %p384 = scmp.lt.s32.totalorder %s23, 1
      %s385 = scalar_select %p384, %s23, 1
      %p386 = scmp.lt.s32.totalorder %s383, 9
      %s387 = scalar_select %p386, %s383, 9
      %s388 = smul.addr %s385, 10
      %s389 = sadd.s32 %s387, %s388
      %s390 = smul.addr %s389, 2
      %s391 = scalar_lea.vmem %s1, %s390
      %s392 = sadd.s32 %s24, 1
      %s393 = sadd.s32 %s24, 2
      %p394 = scmp.lt.s32.totalorder %s23, 1
      %s395 = scalar_select %p394, %s23, 1
      %p396 = scmp.lt.s32.totalorder %s393, 9
      %s397 = scalar_select %p396, %s393, 9
      %s398 = smul.addr %s395, 10
      %s399 = sadd.s32 %s397, %s398
      %s400 = smul.addr %s399, 2
      %s401 = scalar_lea.vmem %s2, %s400
      %s402 = sadd.s32 %s24, 2
      %p403 = scmp.lt.s32.totalorder %s23, 1
      %s404 = scalar_select %p403, %s23, 1
      %p405 = scmp.lt.s32.totalorder %s24, 7
      %s406 = scalar_select %p405, %s24, 7
      %s407 = smul.addr %s404, 8
      %s408 = sadd.s32 %s406, %s407
      %s409 = smul.addr %s408, 4
      %s410 = scalar_lea.vmem %s5, %s409
      %p411 = scmp.lt.s32.totalorder %s23, 1
      %s412 = scalar_select %p411, %s23, 1
      %p413 = scmp.lt.s32.totalorder %s24, 7
      %s414 = scalar_select %p413, %s24, 7
      %s415 = smul.addr %s412, 8
      %s416 = sadd.s32 %s414, %s415
      %s417 = smul.addr %s416, 8
      %s418 = scalar_lea.vmem %s6, %s417
      %p419 = scmp.lt.s32.totalorder %s23, 1
      %s420 = scalar_select %p419, %s23, 1
      %p421 = scmp.lt.s32.totalorder %s24, 7
      %s422 = scalar_select %p421, %s24, 7
      %s423 = smul.addr %s420, 8
      %s424 = sadd.s32 %s422, %s423
      %s425 = smul.addr %s424, 8
      %s426 = scalar_lea.vmem %s7, %s425
      %v428 = vld [vmem:[%s382] sm:$0x3]
      %v429 = vld [vmem:[%s3] sm:$0xf]
      %s430 = scalar_lea.vmem %s3, 4
      %v431 = vld [vmem:[%s430] sm:$0xf]
      %433 = vst [vmem:[#allocation1] ss:$4 sm:$0xff] %v428
      %v434 = vld.sshfl [vmem:[#allocation1] sm:$0xff pattern:$0x73625140]
      %436 = vrot.lane.b32.xlu0 %v434, 127
      %v437 = vpop.permute.xlu0 %436
      %vm438 = vcmask 31744
      %v440 = vsel %vm438, %v431, 0
      %vm442 = vcmask 1041408
      %v444 = vsel %vm442, %v437, 0
      %446 = vmatpush.bf16.msra.mxu0 0
      %447 = vmatpush.bf16.msra.mxu0 0
      %448 = vmatpush.bf16.msra.mxu0 0
      %449 = vmatpush.bf16.msra.mxu0 0
      %450 = vmatpush.bf16.msra.mxu0 0
      %451 = vmatpush.bf16.msra.mxu0 0
      %452 = vmatpush.bf16.msra.mxu0 0
      %453 = vmatpush.bf16.msra.mxu0 %v444
      %454 = vmatmul.bf16.gmra.mxu0 %v440
      %v455 = vpop.f32.mrf.mxu0
      %v456 = vadd.f32 0.0, %v455
      %v457 = vpop.f32.mrf.mxu0
      %458 = vdwg.mxu0
      %v460 = vsel %vm438, %v429, 0
      %v462 = vsel %vm442, %v428, 0
      %464 = vmatpush.bf16.msra.mxu0 0
      %465 = vmatpush.bf16.msra.mxu0 0
      %466 = vmatpush.bf16.msra.mxu0 0
      %467 = vmatpush.bf16.msra.mxu0 0
      %468 = vmatpush.bf16.msra.mxu0 0
      %469 = vmatpush.bf16.msra.mxu0 0
      %470 = vmatpush.bf16.msra.mxu0 0
      %471 = vmatpush.bf16.msra.mxu0 %v462
      %472 = vmatmul.bf16.gmra.mxu0 %v460
      %v473 = vpop.f32.mrf.mxu0
      %v474 = vadd.f32 %v456, %v473
      %v475 = vpop.f32.mrf.mxu0
      %476 = vdwg.mxu0
      %s477 = scalar_lea.vmem %s3, 8
      %v478 = vld [vmem:[%s477] sm:$0xf]
      %479 = vst [vmem:[#allocation1] ss:$4 sm:$0xff] %v428
      %v480 = vld.sshfl [vmem:[#allocation1] sm:$0xff pattern:$0x73625140]
      %482 = vrot.lane.b32.xlu0 %v480, 126
      %v483 = vpop.permute.xlu0 %482
      %v485 = vsel %vm438, %v478, 0
      %v488 = vsel %vm442, %v483, 0
      %490 = vmatpush.bf16.msra.mxu0 0
      %491 = vmatpush.bf16.msra.mxu0 0
      %492 = vmatpush.bf16.msra.mxu0 0
      %493 = vmatpush.bf16.msra.mxu0 0
      %494 = vmatpush.bf16.msra.mxu0 0
      %495 = vmatpush.bf16.msra.mxu0 0
      %496 = vmatpush.bf16.msra.mxu0 0
      %497 = vmatpush.bf16.msra.mxu0 %v488
      %498 = vmatmul.bf16.gmra.mxu0 %v485
      %v499 = vpop.f32.mrf.mxu0
      %v500 = vadd.f32 0.0, %v499
      %v501 = vpop.f32.mrf.mxu0
      %502 = vdwg.mxu0
      %v503 = vadd.f32 %v474, %v500
      %s504 = scalar_lea.vmem %s3, 12
      %v505 = vld [vmem:[%s504] sm:$0xf]
      %506 = vst [vmem:[#allocation1] ss:$4 sm:$0xff] %v428
      %v507 = vld.sshfl [vmem:[#allocation1] sm:$0xff pattern:$0x73625140]
      %509 = vrot.lane.b32.xlu0 %v507, 118
      %v510 = vpop.permute.xlu0 %509
      %v512 = vsel %vm438, %v505, 0
      %v515 = vsel %vm442, %v510, 0
      %517 = vmatpush.bf16.msra.mxu0 0
      %518 = vmatpush.bf16.msra.mxu0 0
      %519 = vmatpush.bf16.msra.mxu0 0
      %520 = vmatpush.bf16.msra.mxu0 0
      %521 = vmatpush.bf16.msra.mxu0 0
      %522 = vmatpush.bf16.msra.mxu0 0
      %523 = vmatpush.bf16.msra.mxu0 0
      %524 = vmatpush.bf16.msra.mxu0 %v515
      %525 = vmatmul.bf16.gmra.mxu0 %v512
      %v526 = vpop.f32.mrf.mxu0
      %v527 = vadd.f32 0.0, %v526
      %v528 = vpop.f32.mrf.mxu0
      %529 = vdwg.mxu0
      %v530 = vadd.f32 %v503, %v527
      %s531 = scalar_lea.vmem %s3, 16
      %v532 = vld [vmem:[%s531] sm:$0xf]
      %533 = vst [vmem:[#allocation1] ss:$4 sm:$0xff] %v428
      %v534 = vld.sshfl [vmem:[#allocation1] sm:$0xff pattern:$0x73625140]
      %536 = vrot.lane.b32.xlu0 %v534, 117
      %v537 = vpop.permute.xlu0 %536
      %v539 = vsel %vm438, %v532, 0
      %v542 = vsel %vm442, %v537, 0
      %544 = vmatpush.bf16.msra.mxu0 0
      %545 = vmatpush.bf16.msra.mxu0 0
      %546 = vmatpush.bf16.msra.mxu0 0
      %547 = vmatpush.bf16.msra.mxu0 0
      %548 = vmatpush.bf16.msra.mxu0 0
      %549 = vmatpush.bf16.msra.mxu0 0
      %550 = vmatpush.bf16.msra.mxu0 0
      %551 = vmatpush.bf16.msra.mxu0 %v542
      %552 = vmatmul.bf16.gmra.mxu0 %v539
      %v553 = vpop.f32.mrf.mxu0
      %v554 = vadd.f32 0.0, %v553
      %v555 = vpop.f32.mrf.mxu0
      %556 = vdwg.mxu0
      %v557 = vadd.f32 %v530, %v554
      %s558 = scalar_lea.vmem %s3, 20
      %v559 = vld [vmem:[%s558] sm:$0xf]
      %560 = vst [vmem:[#allocation1] ss:$4 sm:$0xff] %v428
      %v561 = vld.sshfl [vmem:[#allocation1] sm:$0xff pattern:$0x73625140]
      %563 = vrot.lane.b32.xlu0 %v561, 116
      %v564 = vpop.permute.xlu0 %563
      %v566 = vsel %vm438, %v559, 0
      %v569 = vsel %vm442, %v564, 0
      %571 = vmatpush.bf16.msra.mxu0 0
      %572 = vmatpush.bf16.msra.mxu0 0
      %573 = vmatpush.bf16.msra.mxu0 0
      %574 = vmatpush.bf16.msra.mxu0 0
      %575 = vmatpush.bf16.msra.mxu0 0
      %576 = vmatpush.bf16.msra.mxu0 0
      %577 = vmatpush.bf16.msra.mxu0 0
      %578 = vmatpush.bf16.msra.mxu0 %v569
      %579 = vmatmul.bf16.gmra.mxu0 %v566
      %v580 = vpop.f32.mrf.mxu0
      %v581 = vadd.f32 0.0, %v580
      %v582 = vpop.f32.mrf.mxu0
      %583 = vdwg.mxu0
      %v584 = vadd.f32 %v557, %v581
      %s585 = scalar_lea.vmem %s3, 24
      %v586 = vld [vmem:[%s585] sm:$0xf]
      %587 = vst [vmem:[#allocation1] ss:$4 sm:$0xff] %v428
      %v588 = vld.sshfl [vmem:[#allocation1] sm:$0xff pattern:$0x73625140]
      %590 = vrot.lane.b32.xlu0 %v588, 108
      %v591 = vpop.permute.xlu0 %590
      %v593 = vsel %vm438, %v586, 0
      %v596 = vsel %vm442, %v591, 0
      %598 = vmatpush.bf16.msra.mxu0 0
      %599 = vmatpush.bf16.msra.mxu0 0
      %600 = vmatpush.bf16.msra.mxu0 0
      %601 = vmatpush.bf16.msra.mxu0 0
      %602 = vmatpush.bf16.msra.mxu0 0
      %603 = vmatpush.bf16.msra.mxu0 0
      %604 = vmatpush.bf16.msra.mxu0 0
      %605 = vmatpush.bf16.msra.mxu0 %v596
      %606 = vmatmul.bf16.gmra.mxu0 %v593
      %v607 = vpop.f32.mrf.mxu0
      %v608 = vadd.f32 0.0, %v607
      %v609 = vpop.f32.mrf.mxu0
      %610 = vdwg.mxu0
      %v611 = vadd.f32 %v584, %v608
      %s612 = scalar_lea.vmem %s3, 28
      %v613 = vld [vmem:[%s612] sm:$0xf]
      %614 = vst [vmem:[#allocation1] ss:$4 sm:$0xff] %v428
      %v615 = vld.sshfl [vmem:[#allocation1] sm:$0xff pattern:$0x73625140]
      %617 = vrot.lane.b32.xlu0 %v615, 107
      %v618 = vpop.permute.xlu0 %617
      %v620 = vsel %vm438, %v613, 0
      %v623 = vsel %vm442, %v618, 0
      %625 = vmatpush.bf16.msra.mxu0 0
      %626 = vmatpush.bf16.msra.mxu0 0
      %627 = vmatpush.bf16.msra.mxu0 0
      %628 = vmatpush.bf16.msra.mxu0 0
      %629 = vmatpush.bf16.msra.mxu0 0
      %630 = vmatpush.bf16.msra.mxu0 0
      %631 = vmatpush.bf16.msra.mxu0 0
      %632 = vmatpush.bf16.msra.mxu0 %v623
      %633 = vmatmul.bf16.gmra.mxu0 %v620
      %v634 = vpop.f32.mrf.mxu0
      %v635 = vadd.f32 0.0, %v634
      %v636 = vpop.f32.mrf.mxu0
      %637 = vdwg.mxu0
      %v638 = vadd.f32 %v611, %v635
      %s639 = scalar_lea.vmem %s3, 32
      %v640 = vld [vmem:[%s639] sm:$0xf]
      %641 = vst [vmem:[#allocation1] ss:$4 sm:$0xff] %v428
      %v642 = vld.sshfl [vmem:[#allocation1] sm:$0xff pattern:$0x73625140]
      %644 = vrot.lane.b32.xlu0 %v642, 106
      %v645 = vpop.permute.xlu0 %644
      %v647 = vsel %vm438, %v640, 0
      %v650 = vsel %vm442, %v645, 0
      %652 = vmatpush.bf16.msra.mxu0 0
      %653 = vmatpush.bf16.msra.mxu0 0
      %654 = vmatpush.bf16.msra.mxu0 0
      %655 = vmatpush.bf16.msra.mxu0 0
      %656 = vmatpush.bf16.msra.mxu0 0
      %657 = vmatpush.bf16.msra.mxu0 0
      %658 = vmatpush.bf16.msra.mxu0 0
      %659 = vmatpush.bf16.msra.mxu0 %v650
      %660 = vmatmul.bf16.gmra.mxu0 %v647
      %v661 = vpop.f32.mrf.mxu0
      %v662 = vadd.f32 0.0, %v661
      %v663 = vpop.f32.mrf.mxu0
      %664 = vdwg.mxu0
      %v665 = vadd.f32 %v638, %v662
      %v666 = vld [vmem:[%s391] sm:$0x3]
      %s667 = scalar_lea.vmem %s3, 36
      %v668 = vld [vmem:[%s667] sm:$0xf]
      %v670 = vsel %vm438, %v668, 0
      %v673 = vsel %vm442, %v666, 0
      %675 = vmatpush.bf16.msra.mxu0 0
      %676 = vmatpush.bf16.msra.mxu0 0
      %677 = vmatpush.bf16.msra.mxu0 0
      %678 = vmatpush.bf16.msra.mxu0 0
      %679 = vmatpush.bf16.msra.mxu0 0
      %680 = vmatpush.bf16.msra.mxu0 0
      %681 = vmatpush.bf16.msra.mxu0 0
      %682 = vmatpush.bf16.msra.mxu0 %v673
      %683 = vmatmul.bf16.gmra.mxu0 %v670
      %v684 = vpop.f32.mrf.mxu0
      %v685 = vadd.f32 0.0, %v684
      %v686 = vpop.f32.mrf.mxu0
      %687 = vdwg.mxu0
      %v688 = vadd.f32 %v665, %v685
      %s689 = scalar_lea.vmem %s3, 40
      %v690 = vld [vmem:[%s689] sm:$0xf]
      %691 = vst [vmem:[#allocation1] ss:$4 sm:$0xff] %v666
      %v692 = vld.sshfl [vmem:[#allocation1] sm:$0xff pattern:$0x73625140]
      %694 = vrot.lane.b32.xlu0 %v692, 127
      %v695 = vpop.permute.xlu0 %694
      %v697 = vsel %vm438, %v690, 0
      %v700 = vsel %vm442, %v695, 0
      %702 = vmatpush.bf16.msra.mxu0 0
      %703 = vmatpush.bf16.msra.mxu0 0
      %704 = vmatpush.bf16.msra.mxu0 0
      %705 = vmatpush.bf16.msra.mxu0 0
      %706 = vmatpush.bf16.msra.mxu0 0
      %707 = vmatpush.bf16.msra.mxu0 0
      %708 = vmatpush.bf16.msra.mxu0 0
      %709 = vmatpush.bf16.msra.mxu0 %v700
      %710 = vmatmul.bf16.gmra.mxu0 %v697
      %v711 = vpop.f32.mrf.mxu0
      %v712 = vadd.f32 0.0, %v711
      %v713 = vpop.f32.mrf.mxu0
      %714 = vdwg.mxu0
      %v715 = vadd.f32 %v688, %v712
      %s716 = scalar_lea.vmem %s3, 44
      %v717 = vld [vmem:[%s716] sm:$0xf]
      %718 = vst [vmem:[#allocation1] ss:$4 sm:$0xff] %v666
      %v719 = vld.sshfl [vmem:[#allocation1] sm:$0xff pattern:$0x73625140]
      %721 = vrot.lane.b32.xlu0 %v719, 126
      %v722 = vpop.permute.xlu0 %721
      %v724 = vsel %vm438, %v717, 0
      %v727 = vsel %vm442, %v722, 0
      %729 = vmatpush.bf16.msra.mxu0 0
      %730 = vmatpush.bf16.msra.mxu0 0
      %731 = vmatpush.bf16.msra.mxu0 0
      %732 = vmatpush.bf16.msra.mxu0 0
      %733 = vmatpush.bf16.msra.mxu0 0
      %734 = vmatpush.bf16.msra.mxu0 0
      %735 = vmatpush.bf16.msra.mxu0 0
      %736 = vmatpush.bf16.msra.mxu0 %v727
      %737 = vmatmul.bf16.gmra.mxu0 %v724
      %v738 = vpop.f32.mrf.mxu0
      %v739 = vadd.f32 0.0, %v738
      %v740 = vpop.f32.mrf.mxu0
      %741 = vdwg.mxu0
      %v742 = vadd.f32 %v715, %v739
      %s743 = scalar_lea.vmem %s3, 48
      %v744 = vld [vmem:[%s743] sm:$0xf]
      %745 = vst [vmem:[#allocation1] ss:$4 sm:$0xff] %v666
      %v746 = vld.sshfl [vmem:[#allocation1] sm:$0xff pattern:$0x73625140]
      %748 = vrot.lane.b32.xlu0 %v746, 118
      %v749 = vpop.permute.xlu0 %748
      %v751 = vsel %vm438, %v744, 0
      %v754 = vsel %vm442, %v749, 0
      %756 = vmatpush.bf16.msra.mxu0 0
      %757 = vmatpush.bf16.msra.mxu0 0
      %758 = vmatpush.bf16.msra.mxu0 0
      %759 = vmatpush.bf16.msra.mxu0 0
      %760 = vmatpush.bf16.msra.mxu0 0
      %761 = vmatpush.bf16.msra.mxu0 0
      %762 = vmatpush.bf16.msra.mxu0 0
      %763 = vmatpush.bf16.msra.mxu0 %v754
      %764 = vmatmul.bf16.gmra.mxu0 %v751
      %v765 = vpop.f32.mrf.mxu0
      %v766 = vadd.f32 0.0, %v765
      %v767 = vpop.f32.mrf.mxu0
      %768 = vdwg.mxu0
      %v769 = vadd.f32 %v742, %v766
      %s770 = scalar_lea.vmem %s3, 52
      %v771 = vld [vmem:[%s770] sm:$0xf]
      %772 = vst [vmem:[#allocation1] ss:$4 sm:$0xff] %v666
      %v773 = vld.sshfl [vmem:[#allocation1] sm:$0xff pattern:$0x73625140]
      %775 = vrot.lane.b32.xlu0 %v773, 117
      %v776 = vpop.permute.xlu0 %775
      %v778 = vsel %vm438, %v771, 0
      %v781 = vsel %vm442, %v776, 0
      %783 = vmatpush.bf16.msra.mxu0 0
      %784 = vmatpush.bf16.msra.mxu0 0
      %785 = vmatpush.bf16.msra.mxu0 0
      %786 = vmatpush.bf16.msra.mxu0 0
      %787 = vmatpush.bf16.msra.mxu0 0
      %788 = vmatpush.bf16.msra.mxu0 0
      %789 = vmatpush.bf16.msra.mxu0 0
      %790 = vmatpush.bf16.msra.mxu0 %v781
      %791 = vmatmul.bf16.gmra.mxu0 %v778
      %v792 = vpop.f32.mrf.mxu0
      %v793 = vadd.f32 0.0, %v792
      %v794 = vpop.f32.mrf.mxu0
      %795 = vdwg.mxu0
      %v796 = vadd.f32 %v769, %v793
      %s797 = scalar_lea.vmem %s3, 56
      %v798 = vld [vmem:[%s797] sm:$0xf]
      %799 = vst [vmem:[#allocation1] ss:$4 sm:$0xff] %v666
      %v800 = vld.sshfl [vmem:[#allocation1] sm:$0xff pattern:$0x73625140]
      %802 = vrot.lane.b32.xlu0 %v800, 116
      %v803 = vpop.permute.xlu0 %802
      %v805 = vsel %vm438, %v798, 0
      %v808 = vsel %vm442, %v803, 0
      %810 = vmatpush.bf16.msra.mxu0 0
      %811 = vmatpush.bf16.msra.mxu0 0
      %812 = vmatpush.bf16.msra.mxu0 0
      %813 = vmatpush.bf16.msra.mxu0 0
      %814 = vmatpush.bf16.msra.mxu0 0
      %815 = vmatpush.bf16.msra.mxu0 0
      %816 = vmatpush.bf16.msra.mxu0 0
      %817 = vmatpush.bf16.msra.mxu0 %v808
      %818 = vmatmul.bf16.gmra.mxu0 %v805
      %v819 = vpop.f32.mrf.mxu0
      %v820 = vadd.f32 0.0, %v819
      %v821 = vpop.f32.mrf.mxu0
      %822 = vdwg.mxu0
      %v823 = vadd.f32 %v796, %v820
      %s824 = scalar_lea.vmem %s3, 60
      %v825 = vld [vmem:[%s824] sm:$0xf]
      %826 = vst [vmem:[#allocation1] ss:$4 sm:$0xff] %v666
      %v827 = vld.sshfl [vmem:[#allocation1] sm:$0xff pattern:$0x73625140]
      %829 = vrot.lane.b32.xlu0 %v827, 108
      %v830 = vpop.permute.xlu0 %829
      %v832 = vsel %vm438, %v825, 0
      %v835 = vsel %vm442, %v830, 0
      %837 = vmatpush.bf16.msra.mxu0 0
      %838 = vmatpush.bf16.msra.mxu0 0
      %839 = vmatpush.bf16.msra.mxu0 0
      %840 = vmatpush.bf16.msra.mxu0 0
      %841 = vmatpush.bf16.msra.mxu0 0
      %842 = vmatpush.bf16.msra.mxu0 0
      %843 = vmatpush.bf16.msra.mxu0 0
      %844 = vmatpush.bf16.msra.mxu0 %v835
      %845 = vmatmul.bf16.gmra.mxu0 %v832
      %v846 = vpop.f32.mrf.mxu0
      %v847 = vadd.f32 0.0, %v846
      %v848 = vpop.f32.mrf.mxu0
      %849 = vdwg.mxu0
      %v850 = vadd.f32 %v823, %v847
      %s851 = scalar_lea.vmem %s3, 64
      %v852 = vld [vmem:[%s851] sm:$0xf]
      %853 = vst [vmem:[#allocation1] ss:$4 sm:$0xff] %v666
      %v854 = vld.sshfl [vmem:[#allocation1] sm:$0xff pattern:$0x73625140]
      %856 = vrot.lane.b32.xlu0 %v854, 107
      %v857 = vpop.permute.xlu0 %856
      %v859 = vsel %vm438, %v852, 0
      %v862 = vsel %vm442, %v857, 0
      %864 = vmatpush.bf16.msra.mxu0 0
      %865 = vmatpush.bf16.msra.mxu0 0
      %866 = vmatpush.bf16.msra.mxu0 0
      %867 = vmatpush.bf16.msra.mxu0 0
      %868 = vmatpush.bf16.msra.mxu0 0
      %869 = vmatpush.bf16.msra.mxu0 0
      %870 = vmatpush.bf16.msra.mxu0 0
      %871 = vmatpush.bf16.msra.mxu0 %v862
      %872 = vmatmul.bf16.gmra.mxu0 %v859
      %v873 = vpop.f32.mrf.mxu0
      %v874 = vadd.f32 0.0, %v873
      %v875 = vpop.f32.mrf.mxu0
      %876 = vdwg.mxu0
      %v877 = vadd.f32 %v850, %v874
      %s878 = scalar_lea.vmem %s3, 68
      %v879 = vld [vmem:[%s878] sm:$0xf]
      %880 = vst [vmem:[#allocation1] ss:$4 sm:$0xff] %v666
      %v881 = vld.sshfl [vmem:[#allocation1] sm:$0xff pattern:$0x73625140]
      %883 = vrot.lane.b32.xlu0 %v881, 106
      %v884 = vpop.permute.xlu0 %883
      %v886 = vsel %vm438, %v879, 0
      %v889 = vsel %vm442, %v884, 0
      %891 = vmatpush.bf16.msra.mxu0 0
      %892 = vmatpush.bf16.msra.mxu0 0
      %893 = vmatpush.bf16.msra.mxu0 0
      %894 = vmatpush.bf16.msra.mxu0 0
      %895 = vmatpush.bf16.msra.mxu0 0
      %896 = vmatpush.bf16.msra.mxu0 0
      %897 = vmatpush.bf16.msra.mxu0 0
      %898 = vmatpush.bf16.msra.mxu0 %v889
      %899 = vmatmul.bf16.gmra.mxu0 %v886
      %v900 = vpop.f32.mrf.mxu0
      %v901 = vadd.f32 0.0, %v900
      %v902 = vpop.f32.mrf.mxu0
      %903 = vdwg.mxu0
      %v904 = vadd.f32 %v877, %v901
      %v905 = vld [vmem:[%s401] sm:$0x3]
      %s906 = scalar_lea.vmem %s3, 72
      %v907 = vld [vmem:[%s906] sm:$0xf]
      %v909 = vsel %vm438, %v907, 0
      %v912 = vsel %vm442, %v905, 0
      %914 = vmatpush.bf16.msra.mxu0 0
      %915 = vmatpush.bf16.msra.mxu0 0
      %916 = vmatpush.bf16.msra.mxu0 0
      %917 = vmatpush.bf16.msra.mxu0 0
      %918 = vmatpush.bf16.msra.mxu0 0
      %919 = vmatpush.bf16.msra.mxu0 0
      %920 = vmatpush.bf16.msra.mxu0 0
      %921 = vmatpush.bf16.msra.mxu0 %v912
      %922 = vmatmul.bf16.gmra.mxu0 %v909
      %v923 = vpop.f32.mrf.mxu0
      %v924 = vadd.f32 0.0, %v923
      %v925 = vpop.f32.mrf.mxu0
      %926 = vdwg.mxu0
      %v927 = vadd.f32 %v904, %v924
      %s928 = scalar_lea.vmem %s3, 76
      %v929 = vld [vmem:[%s928] sm:$0xf]
      %930 = vst [vmem:[#allocation1] ss:$4 sm:$0xff] %v905
      %v931 = vld.sshfl [vmem:[#allocation1] sm:$0xff pattern:$0x73625140]
      %933 = vrot.lane.b32.xlu0 %v931, 127
      %v934 = vpop.permute.xlu0 %933
      %v936 = vsel %vm438, %v929, 0
      %v939 = vsel %vm442, %v934, 0
      %941 = vmatpush.bf16.msra.mxu0 0
      %942 = vmatpush.bf16.msra.mxu0 0
      %943 = vmatpush.bf16.msra.mxu0 0
      %944 = vmatpush.bf16.msra.mxu0 0
      %945 = vmatpush.bf16.msra.mxu0 0
      %946 = vmatpush.bf16.msra.mxu0 0
      %947 = vmatpush.bf16.msra.mxu0 0
      %948 = vmatpush.bf16.msra.mxu0 %v939
      %949 = vmatmul.bf16.gmra.mxu0 %v936
      %v950 = vpop.f32.mrf.mxu0
      %v951 = vadd.f32 0.0, %v950
      %v952 = vpop.f32.mrf.mxu0
      %953 = vdwg.mxu0
      %v954 = vadd.f32 %v927, %v951
      %s955 = scalar_lea.vmem %s3, 80
      %v956 = vld [vmem:[%s955] sm:$0xf]
      %957 = vst [vmem:[#allocation1] ss:$4 sm:$0xff] %v905
      %v958 = vld.sshfl [vmem:[#allocation1] sm:$0xff pattern:$0x73625140]
      %960 = vrot.lane.b32.xlu0 %v958, 126
      %v961 = vpop.permute.xlu0 %960
      %v963 = vsel %vm438, %v956, 0
      %v966 = vsel %vm442, %v961, 0
      %968 = vmatpush.bf16.msra.mxu0 0
      %969 = vmatpush.bf16.msra.mxu0 0
      %970 = vmatpush.bf16.msra.mxu0 0
      %971 = vmatpush.bf16.msra.mxu0 0
      %972 = vmatpush.bf16.msra.mxu0 0
      %973 = vmatpush.bf16.msra.mxu0 0
      %974 = vmatpush.bf16.msra.mxu0 0
      %975 = vmatpush.bf16.msra.mxu0 %v966
      %976 = vmatmul.bf16.gmra.mxu0 %v963
      %v977 = vpop.f32.mrf.mxu0
      %v978 = vadd.f32 0.0, %v977
      %v979 = vpop.f32.mrf.mxu0
      %980 = vdwg.mxu0
      %v981 = vadd.f32 %v954, %v978
      %s982 = scalar_lea.vmem %s3, 84
      %v983 = vld [vmem:[%s982] sm:$0xf]
      %984 = vst [vmem:[#allocation1] ss:$4 sm:$0xff] %v905
      %v985 = vld.sshfl [vmem:[#allocation1] sm:$0xff pattern:$0x73625140]
      %987 = vrot.lane.b32.xlu0 %v985, 118
      %v988 = vpop.permute.xlu0 %987
      %v990 = vsel %vm438, %v983, 0
      %v993 = vsel %vm442, %v988, 0
      %995 = vmatpush.bf16.msra.mxu0 0
      %996 = vmatpush.bf16.msra.mxu0 0
      %997 = vmatpush.bf16.msra.mxu0 0
      %998 = vmatpush.bf16.msra.mxu0 0
      %999 = vmatpush.bf16.msra.mxu0 0
      %1000 = vmatpush.bf16.msra.mxu0 0
      %1001 = vmatpush.bf16.msra.mxu0 0
      %1002 = vmatpush.bf16.msra.mxu0 %v993
      %1003 = vmatmul.bf16.gmra.mxu0 %v990
      %v1004 = vpop.f32.mrf.mxu0
      %v1005 = vadd.f32 0.0, %v1004
      %v1006 = vpop.f32.mrf.mxu0
      %1007 = vdwg.mxu0
      %v1008 = vadd.f32 %v981, %v1005
      %s1009 = scalar_lea.vmem %s3, 88
      %v1010 = vld [vmem:[%s1009] sm:$0xf]
      %1011 = vst [vmem:[#allocation1] ss:$4 sm:$0xff] %v905
      %v1012 = vld.sshfl [vmem:[#allocation1] sm:$0xff pattern:$0x73625140]
      %1014 = vrot.lane.b32.xlu0 %v1012, 117
      %v1015 = vpop.permute.xlu0 %1014
      %v1017 = vsel %vm438, %v1010, 0
      %v1020 = vsel %vm442, %v1015, 0
      %1022 = vmatpush.bf16.msra.mxu0 0
      %1023 = vmatpush.bf16.msra.mxu0 0
      %1024 = vmatpush.bf16.msra.mxu0 0
      %1025 = vmatpush.bf16.msra.mxu0 0
      %1026 = vmatpush.bf16.msra.mxu0 0
      %1027 = vmatpush.bf16.msra.mxu0 0
      %1028 = vmatpush.bf16.msra.mxu0 0
      %1029 = vmatpush.bf16.msra.mxu0 %v1020
      %1030 = vmatmul.bf16.gmra.mxu0 %v1017
      %v1031 = vpop.f32.mrf.mxu0
      %v1032 = vadd.f32 0.0, %v1031
      %v1033 = vpop.f32.mrf.mxu0
      %1034 = vdwg.mxu0
      %v1035 = vadd.f32 %v1008, %v1032
      %s1036 = scalar_lea.vmem %s3, 92
      %v1037 = vld [vmem:[%s1036] sm:$0xf]
      %1038 = vst [vmem:[#allocation1] ss:$4 sm:$0xff] %v905
      %v1039 = vld.sshfl [vmem:[#allocation1] sm:$0xff pattern:$0x73625140]
      %1041 = vrot.lane.b32.xlu0 %v1039, 116
      %v1042 = vpop.permute.xlu0 %1041
      %v1044 = vsel %vm438, %v1037, 0
      %v1047 = vsel %vm442, %v1042, 0
      %1049 = vmatpush.bf16.msra.mxu0 0
      %1050 = vmatpush.bf16.msra.mxu0 0
      %1051 = vmatpush.bf16.msra.mxu0 0
      %1052 = vmatpush.bf16.msra.mxu0 0
      %1053 = vmatpush.bf16.msra.mxu0 0
      %1054 = vmatpush.bf16.msra.mxu0 0
      %1055 = vmatpush.bf16.msra.mxu0 0
      %1056 = vmatpush.bf16.msra.mxu0 %v1047
      %1057 = vmatmul.bf16.gmra.mxu0 %v1044
      %v1058 = vpop.f32.mrf.mxu0
      %v1059 = vadd.f32 0.0, %v1058
      %v1060 = vpop.f32.mrf.mxu0
      %1061 = vdwg.mxu0
      %v1062 = vadd.f32 %v1035, %v1059
      %s1063 = scalar_lea.vmem %s3, 96
      %v1064 = vld [vmem:[%s1063] sm:$0xf]
      %1065 = vst [vmem:[#allocation1] ss:$4 sm:$0xff] %v905
      %v1066 = vld.sshfl [vmem:[#allocation1] sm:$0xff pattern:$0x73625140]
      %1068 = vrot.lane.b32.xlu0 %v1066, 108
      %v1069 = vpop.permute.xlu0 %1068
      %v1071 = vsel %vm438, %v1064, 0
      %v1074 = vsel %vm442, %v1069, 0
      %1076 = vmatpush.bf16.msra.mxu0 0
      %1077 = vmatpush.bf16.msra.mxu0 0
      %1078 = vmatpush.bf16.msra.mxu0 0
      %1079 = vmatpush.bf16.msra.mxu0 0
      %1080 = vmatpush.bf16.msra.mxu0 0
      %1081 = vmatpush.bf16.msra.mxu0 0
      %1082 = vmatpush.bf16.msra.mxu0 0
      %1083 = vmatpush.bf16.msra.mxu0 %v1074
      %1084 = vmatmul.bf16.gmra.mxu0 %v1071
      %v1085 = vpop.f32.mrf.mxu0
      %v1086 = vadd.f32 0.0, %v1085
      %v1087 = vpop.f32.mrf.mxu0
      %1088 = vdwg.mxu0
      %v1089 = vadd.f32 %v1062, %v1086
      %s1090 = scalar_lea.vmem %s3, 100
      %v1091 = vld [vmem:[%s1090] sm:$0xf]
      %1092 = vst [vmem:[#allocation1] ss:$4 sm:$0xff] %v905
      %v1093 = vld.sshfl [vmem:[#allocation1] sm:$0xff pattern:$0x73625140]
      %1095 = vrot.lane.b32.xlu0 %v1093, 107
      %v1096 = vpop.permute.xlu0 %1095
      %v1098 = vsel %vm438, %v1091, 0
      %v1101 = vsel %vm442, %v1096, 0
      %1103 = vmatpush.bf16.msra.mxu0 0
      %1104 = vmatpush.bf16.msra.mxu0 0
      %1105 = vmatpush.bf16.msra.mxu0 0
      %1106 = vmatpush.bf16.msra.mxu0 0
      %1107 = vmatpush.bf16.msra.mxu0 0
      %1108 = vmatpush.bf16.msra.mxu0 0
      %1109 = vmatpush.bf16.msra.mxu0 0
      %1110 = vmatpush.bf16.msra.mxu0 %v1101
      %1111 = vmatmul.bf16.gmra.mxu0 %v1098
      %v1112 = vpop.f32.mrf.mxu0
      %v1113 = vadd.f32 0.0, %v1112
      %v1114 = vpop.f32.mrf.mxu0
      %1115 = vdwg.mxu0
      %v1116 = vadd.f32 %v1089, %v1113
      %s1117 = scalar_lea.vmem %s3, 104
      %v1118 = vld [vmem:[%s1117] sm:$0xf]
      %1119 = vst [vmem:[#allocation1] ss:$4 sm:$0xff] %v905
      %v1120 = vld.sshfl [vmem:[#allocation1] sm:$0xff pattern:$0x73625140]
      %1122 = vrot.lane.b32.xlu0 %v1120, 106
      %v1123 = vpop.permute.xlu0 %1122
      %v1125 = vsel %vm438, %v1118, 0
      %v1128 = vsel %vm442, %v1123, 0
      %1130 = vmatpush.bf16.msra.mxu0 0
      %1131 = vmatpush.bf16.msra.mxu0 0
      %1132 = vmatpush.bf16.msra.mxu0 0
      %1133 = vmatpush.bf16.msra.mxu0 0
      %1134 = vmatpush.bf16.msra.mxu0 0
      %1135 = vmatpush.bf16.msra.mxu0 0
      %1136 = vmatpush.bf16.msra.mxu0 0
      %1137 = vmatpush.bf16.msra.mxu0 %v1128
      %1138 = vmatmul.bf16.gmra.mxu0 %v1125
      %v1139 = vpop.f32.mrf.mxu0
      %v1140 = vadd.f32 0.0, %v1139
      %v1141 = vpop.f32.mrf.mxu0
      %1142 = vdwg.mxu0
      %v1143 = vadd.f32 %v1116, %v1140
      %v1144 = vpack.c.bf16 %v1143, %v1143
      %vm1145 = vcmask 814080
      %1146 = vst.msk [vmem:[%s410] sm:$0xf] %vm1145, %v1144
      %v1147 = vld [vmem:[%s4] sm:$0x1]
      %v1149 = vperm.slane %v1147, 0
      %v1151 = vmul.f32 %v1143, %v1149
      %vm1152 = vcmask 818176
      %v1153 = vsel %vm1152, %v1151, 0.0
      %1154 = vadd.xlane.f32.xlu0 %v1153
      %v1155 = vpop.xlane.xlu0 %1154
      %vm1156 = vcmask 7168
      %1157 = vst.msk [vmem:[%s418] sm:$0xff] %vm1156, %v1155
      %v1158 = vmul.f32 %v1143, %v1143
      %v1159 = vmul.f32 %v1158, %v1149
      %v1160 = vsel %vm1152, %v1159, 0.0
      %1161 = vadd.xlane.f32.xlu0 %v1160
      %v1162 = vpop.xlane.xlu0 %1161
      %1163 = vst.msk [vmem:[%s426] sm:$0xff] %vm1156, %v1162
      %p1164 = scmp.lt.s32.totalorder %s23, 1
      %s1165 = scalar_select %p1164, %s23, 1
      %p1166 = scmp.lt.s32.totalorder %s24, 7
      %s1167 = scalar_select %p1166, %s24, 7
      %s1168 = smul.addr %s1165, 8
      %s1169 = sadd.s32 %s1167, %s1168
      %s1170 = smul.addr %s1169, 4
      %s1171 = scalar_lea.vmem %s5, %s1170
      %p1172 = scmp.lt.s32.totalorder %s23, 1
      %s1173 = scalar_select %p1172, %s23, 1
      %p1174 = scmp.lt.s32.totalorder %s24, 7
      %s1175 = scalar_select %p1174, %s24, 7
      %s1176 = smul.addr %s1173, 8
      %s1177 = sadd.s32 %s1175, %s1176
      %s1178 = smul.addr %s1177, 8
      %s1179 = scalar_lea.vmem %s6, %s1178
      %p1180 = scmp.lt.s32.totalorder %s23, 1
      %s1181 = scalar_select %p1180, %s23, 1
      %p1182 = scmp.lt.s32.totalorder %s24, 7
      %s1183 = scalar_select %p1182, %s24, 7
      %s1184 = smul.addr %s1181, 8
      %s1185 = sadd.s32 %s1183, %s1184
      %s1186 = smul.addr %s1185, 8
      %s1187 = scalar_lea.vmem %s7, %s1186
      // Predicated region
      $region41: #{simple_conv3d_forward.2} parent=39 // pred_check
        %p1188 = pneg %p181
      $region42: #{simple_conv3d_forward.2} parent=39 // pred_check_branch
        %1190 = sbr.rel (%p1188) target = $region44
      $region43: #{simple_conv3d_forward.2} parent=39 // pred_region
        _
      $region44: #{simple_conv3d_forward.2} parent=39 // pred_fallthru
        _
      // Predicated region
      $region45: #{simple_conv3d_forward.2} parent=39 // pred_check
        %p1191 = pneg %p209
      $region46: #{simple_conv3d_forward.2} parent=39 // pred_check_branch
        %1193 = sbr.rel (%p1191) target = $region48
      $region47: #{simple_conv3d_forward.2} parent=39 // pred_region
        _
      $region48: #{simple_conv3d_forward.2} parent=39 // pred_fallthru
        _
      // Predicated region
      $region49: #{simple_conv3d_forward.2} parent=39 // pred_check
        %p1194 = pneg %p237
      $region50: #{simple_conv3d_forward.2} parent=39 // pred_check_branch
        %1196 = sbr.rel (%p1194) target = $region52
      $region51: #{simple_conv3d_forward.2} parent=39 // pred_region
        _
      $region52: #{simple_conv3d_forward.2} parent=39 // pred_fallthru
        _
    $region40: #{simple_conv3d_forward.2} parent=5 // pred_fallthru
      _
    %p1197 = scmp.le.s32.totalorder 2, %s14
    // Predicated region
    $region53: #{simple_conv3d_forward.2} parent=5 // pred_check
      %p1198 = pneg %p1197
    $region54: #{simple_conv3d_forward.2} parent=5 // pred_check_branch
      %1200 = sbr.rel (%p1198) target = $region56
    $region55: #{simple_conv3d_forward.2} parent=5 // pred_region
      %s1201 = ssub.s32 %s14, 2
      // Predicated region
      $region57: #{simple_conv3d_forward.2} parent=55 // pred_check
        %p1202 = pneg %p187
      $region58: #{simple_conv3d_forward.2} parent=55 // pred_check_branch
        %1204 = sbr.rel (%p1202) target = $region60
      $region59: #{simple_conv3d_forward.2} parent=55 // pred_region
        %p1205 = scmp.lt.s32.totalorder %s25, 1
        %s1206 = scalar_select %p1205, %s25, 1
        %p1207 = scmp.lt.s32.totalorder %s26, 7
        %s1208 = scalar_select %p1207, %s26, 7
        %s1209 = smul.addr %s1206, 8
        %s1210 = sadd.s32 %s1208, %s1209
        %s1211 = smul.addr %s1210, 4
        %s1212 = scalar_lea.vmem %s5, %s1211
      $region60: #{simple_conv3d_forward.2} parent=55 // pred_fallthru
        _
      // Predicated region
      $region61: #{simple_conv3d_forward.2} parent=55 // pred_check
        %p1213 = pneg %p215
      $region62: #{simple_conv3d_forward.2} parent=55 // pred_check_branch
        %1215 = sbr.rel (%p1213) target = $region64
      $region63: #{simple_conv3d_forward.2} parent=55 // pred_region
        %p1216 = scmp.lt.s32.totalorder %s25, 1
        %s1217 = scalar_select %p1216, %s25, 1
        %p1218 = scmp.lt.s32.totalorder %s26, 7
        %s1219 = scalar_select %p1218, %s26, 7
        %s1220 = smul.addr %s1217, 8
        %s1221 = sadd.s32 %s1219, %s1220
        %s1222 = smul.addr %s1221, 8
        %s1223 = scalar_lea.vmem %s6, %s1222
      $region64: #{simple_conv3d_forward.2} parent=55 // pred_fallthru
        _
      // Predicated region
      $region65: #{simple_conv3d_forward.2} parent=55 // pred_check
        %p1224 = pneg %p243
      $region66: #{simple_conv3d_forward.2} parent=55 // pred_check_branch
        %1226 = sbr.rel (%p1224) target = $region68
      $region67: #{simple_conv3d_forward.2} parent=55 // pred_region
        %p1227 = scmp.lt.s32.totalorder %s25, 1
        %s1228 = scalar_select %p1227, %s25, 1
        %p1229 = scmp.lt.s32.totalorder %s26, 7
        %s1230 = scalar_select %p1229, %s26, 7
        %s1231 = smul.addr %s1228, 8
        %s1232 = sadd.s32 %s1230, %s1231
        %s1233 = smul.addr %s1232, 8
        %s1234 = scalar_lea.vmem %s7, %s1233
      $region68: #{simple_conv3d_forward.2} parent=55 // pred_fallthru
        _
    $region56: #{simple_conv3d_forward.2} parent=5 // pred_fallthru
      _
  $region6: #{simple_conv3d_forward.2} parent=0 // loop_footer
    %s18 = sadd.s32 1, %s14
  $region7: #{simple_conv3d_forward.2} parent=0 // loop_footer_branch
    %13 = sbr.rel target = $region3
  $region8: #{simple_conv3d_forward.2} parent=0 // loop_exit
    _

</llo_original>
